<compile_context>
chip_gen: v6e
topology: v6e:2x2x1
jax: 0.10.0
libtpu: 0.0.40
codegen_flags: <defaults>
</compile_context>

<pallas_src>
import math

import jax
import jax.numpy as jnp
from jax.experimental import pallas as pl
from jax.experimental.pallas import tpu as pltpu

IN_FEATURES = 6
HIDDEN = 32
OUT_FEATURES = 9


def _qnet_kernel(x_ref, w1_ref, w2_ref, w3_ref, w4_ref, b_ref, out_ref):
    """One batch tile of the 4-layer MLP.

    Matmul operands may be bf16 (f32 accumulation via preferred_element_type);
    bias-add / ReLU are kept in f32.
    """
    mm_dtype = w1_ref.dtype
    b = b_ref[...]  # (4, 32) f32, VMEM-resident across grid steps

    h = jnp.dot(x_ref[...], w1_ref[...], preferred_element_type=jnp.float32)
    h = jnp.maximum(h + b[0:1, :], 0.0)
    h = jnp.dot(h.astype(mm_dtype), w2_ref[...], preferred_element_type=jnp.float32)
    h = jnp.maximum(h + b[1:2, :], 0.0)
    h = jnp.dot(h.astype(mm_dtype), w3_ref[...], preferred_element_type=jnp.float32)
    h = jnp.maximum(h + b[2:3, :], 0.0)
    out = jnp.dot(h.astype(mm_dtype), w4_ref[...], preferred_element_type=jnp.float32)
    out_ref[...] = (out + b[3:4, :OUT_FEATURES]).astype(out_ref.dtype)


def reference_forward(x, params):
    h = jnp.maximum(x @ params["w1"] + params["b1"], 0.0)
    h = jnp.maximum(h @ params["w2"] + params["b2"], 0.0)
    h = jnp.maximum(h @ params["w3"] + params["b3"], 0.0)
    return h @ params["w4"] + params["b4"]


def qnetwork_forward(x, params, *, tile_b=256, use_bf16=True, min_pallas_batch=64):
    """x: (B, 6) float32. params: dict of (in,out) weights and (1,out) biases."""
    B = x.shape[0]

    # Tiny batches: a Pallas dispatch is 100% fixed overhead here; let fused XLA
    # handle them (semantics identical).
    if B < min_pallas_batch:
        return reference_forward(x, params)

    assert tile_b % 8 == 0, "batch tile must be a multiple of 8 sublanes"
    mm_dtype = jnp.bfloat16 if use_bf16 else jnp.float32

    w1 = params["w1"].astype(mm_dtype)
    w2 = params["w2"].astype(mm_dtype)
    w3 = params["w3"].astype(mm_dtype)
    w4 = params["w4"].astype(mm_dtype)

    # Fold the four bias vectors into one (4, 32) f32 operand (b4 zero-padded)
    # to cut the number of tiny DMA'd operands from 9 to 6.
    b_stack = jnp.zeros((4, HIDDEN), jnp.float32)
    b_stack = b_stack.at[0, :].set(params["b1"].reshape(-1))
    b_stack = b_stack.at[1, :].set(params["b2"].reshape(-1))
    b_stack = b_stack.at[2, :].set(params["b3"].reshape(-1))
    b_stack = b_stack.at[3, :OUT_FEATURES].set(params["b4"].reshape(-1))

    # Pad the batch so the grid is exact and the tail block store needs no mask.
    grid_b = pl.cdiv(B, tile_b)
    b_pad = grid_b * tile_b
    x_mm = x.astype(mm_dtype)
    if b_pad != B:
        x_mm = jnp.pad(x_mm, ((0, b_pad - B), (0, 0)))

    out = pl.pallas_call(
        _qnet_kernel,
        out_shape=jax.ShapeDtypeStruct((b_pad, OUT_FEATURES), jnp.float32),
        grid=(grid_b,),
        in_specs=[
            # x tiled over the batch -> double-buffered DMA against compute.
            pl.BlockSpec((tile_b, IN_FEATURES), lambda i: (i, 0)),
            # Weights / stacked bias: constant index_map -> VMEM-resident.
            pl.BlockSpec((IN_FEATURES, HIDDEN), lambda i: (0, 0)),
            pl.BlockSpec((HIDDEN, HIDDEN), lambda i: (0, 0)),
            pl.BlockSpec((HIDDEN, HIDDEN), lambda i: (0, 0)),
            pl.BlockSpec((HIDDEN, OUT_FEATURES), lambda i: (0, 0)),
            pl.BlockSpec((4, HIDDEN), lambda i: (0, 0)),
        ],
        out_specs=pl.BlockSpec((tile_b, OUT_FEATURES), lambda i: (i, 0)),
        compiler_params=pltpu.CompilerParams(
            # Batch tiles are independent -> shard across v7x's 2 TensorCores.
            dimension_semantics=("parallel",)),
    )(x_mm, w1, w2, w3, w4, b_stack)

    return out[:B] if b_pad != B else out


def init_params(key):
    """Deterministic init matching nn.Linear default: U(-1/sqrt(in), 1/sqrt(in))."""
    dims = [(IN_FEATURES, HIDDEN), (HIDDEN, HIDDEN), (HIDDEN, HIDDEN), (HIDDEN, OUT_FEATURES)]
    params = {}
    keys = jax.random.split(key, 2 * len(dims))
    for i, (fan_in, fan_out) in enumerate(dims):
        bound = 1.0 / math.sqrt(fan_in)
        params[f"w{i + 1}"] = jax.random.uniform(
            keys[2 * i], (fan_in, fan_out), minval=-bound, maxval=bound, dtype=jnp.float32)
        params[f"b{i + 1}"] = jax.random.uniform(
            keys[2 * i + 1], (1, fan_out), minval=-bound, maxval=bound, dtype=jnp.float32)
    return params


if __name__ == "__main__":
    key = jax.random.PRNGKey(0)
    pkey, xkey = jax.random.split(key)
    params = init_params(pkey)

    # Batch large enough to exercise the tiled Pallas path, and not a multiple
    # of the 256-row tile (384 -> 2 grid steps with a padded tail).
    B = 384
    x = jax.random.normal(xkey, (B, IN_FEATURES), dtype=jnp.float32)
    ref = reference_forward(x, params)

    # 1) Exact f32 path.
    out_f32 = jax.block_until_ready(qnetwork_forward(x, params, use_bf16=False))
    assert out_f32.shape == (B, OUT_FEATURES), out_f32.shape
    assert jnp.allclose(out_f32, ref, atol=1e-5, rtol=1e-5), "f32 kernel mismatch"

    # 2) bf16 matmul operands with f32 accumulation (default fast path on v6e/v7x);
    #    tolerance loosened for the bf16 operand rounding.
    out_bf16 = jax.block_until_ready(qnetwork_forward(x, params, use_bf16=True))
    assert out_bf16.shape == (B, OUT_FEATURES), out_bf16.shape
    assert jnp.allclose(out_bf16, ref, atol=5e-2, rtol=5e-2), "bf16 kernel mismatch"

    # 3) Tiny batch (original test size) takes the XLA fallback path.
    out_small = jax.block_until_ready(qnetwork_forward(x[:2], params))
    assert jnp.allclose(out_small, ref[:2], atol=1e-5, rtol=1e-5), "fallback mismatch"

    print("KERNEL_OK")
</pallas_src>

<mosaic_0001>
module attributes {stable_mosaic.version = 11 : i64} {
  func.func @_qnet_kernel(%arg0: i32, %arg1: memref<256x6xf32, #tpu.memory_space<vmem>>, %arg2: memref<6x32xf32, #tpu.memory_space<vmem>>, %arg3: memref<32x32xf32, #tpu.memory_space<vmem>>, %arg4: memref<32x32xf32, #tpu.memory_space<vmem>>, %arg5: memref<32x9xf32, #tpu.memory_space<vmem>>, %arg6: memref<4x32xf32, #tpu.memory_space<vmem>>, %arg7: memref<256x9xf32, #tpu.memory_space<vmem>>) attributes {dimension_semantics = [#tpu.dimension_semantics<parallel>], iteration_bounds = array<i64: 2>, scalar_prefetch = 0 : i64, scratch_operands = 0 : i64, tpu.core_type = #tpu.core_type<tc>, window_params = [{transform_indices = @transform_0, window_bounds = array<i64: 256, 6>}, {pipeline_mode = #tpu.pipeline_mode<synchronous>, transform_indices = @transform_1, window_bounds = array<i64: 6, 32>}, {pipeline_mode = #tpu.pipeline_mode<synchronous>, transform_indices = @transform_2, window_bounds = array<i64: 32, 32>}, {pipeline_mode = #tpu.pipeline_mode<synchronous>, transform_indices = @transform_3, window_bounds = array<i64: 32, 32>}, {pipeline_mode = #tpu.pipeline_mode<synchronous>, transform_indices = @transform_4, window_bounds = array<i64: 32, 9>}, {pipeline_mode = #tpu.pipeline_mode<synchronous>, transform_indices = @transform_5, window_bounds = array<i64: 4, 32>}, {transform_indices = @transform_6, window_bounds = array<i64: 256, 9>}]} {
    %c0 = arith.constant 0 : index
    %c0_0 = arith.constant 0 : index
    %0 = vector.load %arg6[%c0, %c0_0] : memref<4x32xf32, #tpu.memory_space<vmem>>, vector<4x32xf32>
    %c0_1 = arith.constant 0 : index
    %c0_2 = arith.constant 0 : index
    %1 = vector.load %arg1[%c0_1, %c0_2] : memref<256x6xf32, #tpu.memory_space<vmem>>, vector<256x6xf32>
    %c0_3 = arith.constant 0 : index
    %c0_4 = arith.constant 0 : index
    %2 = vector.load %arg2[%c0_3, %c0_4] : memref<6x32xf32, #tpu.memory_space<vmem>>, vector<6x32xf32>
    %cst = arith.constant dense<0.000000e+00> : vector<256x32xf32>
    %3 = tpu.matmul %1, %2, %cst {dimension_numbers = #tpu.dot_dimension_numbers<[1], [0], [0], [1], [0, 0, 1, 1], [], []>} : vector<256x6xf32>, vector<6x32xf32>, vector<256x32xf32> -> vector<256x32xf32>
    %4 = vector.extract_strided_slice %0 {offsets = [0, 0], sizes = [1, 32], strides = [1, 1]} : vector<4x32xf32> to vector<1x32xf32>
    %5 = vector.broadcast %4 : vector<1x32xf32> to vector<256x32xf32>
    %6 = arith.addf %3, %5 : vector<256x32xf32>
    %cst_5 = arith.constant 0.000000e+00 : f32
    %7 = vector.broadcast %cst_5 : f32 to vector<256x32xf32>
    %8 = arith.maximumf %6, %7 : vector<256x32xf32>
    %c0_6 = arith.constant 0 : index
    %c0_7 = arith.constant 0 : index
    %9 = vector.load %arg3[%c0_6, %c0_7] : memref<32x32xf32, #tpu.memory_space<vmem>>, vector<32x32xf32>
    %cst_8 = arith.constant dense<0.000000e+00> : vector<256x32xf32>
    %10 = tpu.matmul %8, %9, %cst_8 {dimension_numbers = #tpu.dot_dimension_numbers<[1], [0], [0], [1], [0, 0, 1, 1], [], []>} : vector<256x32xf32>, vector<32x32xf32>, vector<256x32xf32> -> vector<256x32xf32>
    %11 = vector.extract_strided_slice %0 {offsets = [1, 0], sizes = [1, 32], strides = [1, 1]} : vector<4x32xf32> to vector<1x32xf32>
    %12 = vector.broadcast %11 : vector<1x32xf32> to vector<256x32xf32>
    %13 = arith.addf %10, %12 : vector<256x32xf32>
    %cst_9 = arith.constant 0.000000e+00 : f32
    %14 = vector.broadcast %cst_9 : f32 to vector<256x32xf32>
    %15 = arith.maximumf %13, %14 : vector<256x32xf32>
    %c0_10 = arith.constant 0 : index
    %c0_11 = arith.constant 0 : index
    %16 = vector.load %arg4[%c0_10, %c0_11] : memref<32x32xf32, #tpu.memory_space<vmem>>, vector<32x32xf32>
    %cst_12 = arith.constant dense<0.000000e+00> : vector<256x32xf32>
    %17 = tpu.matmul %15, %16, %cst_12 {dimension_numbers = #tpu.dot_dimension_numbers<[1], [0], [0], [1], [0, 0, 1, 1], [], []>} : vector<256x32xf32>, vector<32x32xf32>, vector<256x32xf32> -> vector<256x32xf32>
    %18 = vector.extract_strided_slice %0 {offsets = [2, 0], sizes = [1, 32], strides = [1, 1]} : vector<4x32xf32> to vector<1x32xf32>
    %19 = vector.broadcast %18 : vector<1x32xf32> to vector<256x32xf32>
    %20 = arith.addf %17, %19 : vector<256x32xf32>
    %cst_13 = arith.constant 0.000000e+00 : f32
    %21 = vector.broadcast %cst_13 : f32 to vector<256x32xf32>
    %22 = arith.maximumf %20, %21 : vector<256x32xf32>
    %c0_14 = arith.constant 0 : index
    %c0_15 = arith.constant 0 : index
    %23 = vector.load %arg5[%c0_14, %c0_15] : memref<32x9xf32, #tpu.memory_space<vmem>>, vector<32x9xf32>
    %cst_16 = arith.constant dense<0.000000e+00> : vector<256x9xf32>
    %24 = tpu.matmul %22, %23, %cst_16 {dimension_numbers = #tpu.dot_dimension_numbers<[1], [0], [0], [1], [0, 0, 1, 1], [], []>} : vector<256x32xf32>, vector<32x9xf32>, vector<256x9xf32> -> vector<256x9xf32>
    %25 = vector.extract_strided_slice %0 {offsets = [3, 0], sizes = [1, 9], strides = [1, 1]} : vector<4x32xf32> to vector<1x9xf32>
    %26 = vector.broadcast %25 : vector<1x9xf32> to vector<256x9xf32>
    %27 = arith.addf %24, %26 : vector<256x9xf32>
    %c0_17 = arith.constant 0 : index
    %c0_18 = arith.constant 0 : index
    %28 = vector.load %arg7[%c0_17, %c0_18] : memref<256x9xf32, #tpu.memory_space<vmem>>, vector<256x9xf32>
    tpu.vector_store %arg7[%c0_17, %c0_18], %27 {strides = array<i32>} : memref<256x9xf32, #tpu.memory_space<vmem>>, vector<256x9xf32>,
    return
  }
  func.func @transform_0(%arg0: i32) -> (i32, i32) {
    %c0_i32 = arith.constant 0 : i32
    %c0_i32_0 = arith.constant 0 : i32
    return %arg0, %c0_i32 : i32, i32
  }
  func.func @transform_1(%arg0: i32) -> (i32, i32) {
    %c0_i32 = arith.constant 0 : i32
    %c0_i32_0 = arith.constant 0 : i32
    %c0_i32_1 = arith.constant 0 : i32
    return %c0_i32, %c0_i32_0 : i32, i32
  }
  func.func @transform_2(%arg0: i32) -> (i32, i32) {
    %c0_i32 = arith.constant 0 : i32
    %c0_i32_0 = arith.constant 0 : i32
    %c0_i32_1 = arith.constant 0 : i32
    return %c0_i32, %c0_i32_0 : i32, i32
  }
  func.func @transform_3(%arg0: i32) -> (i32, i32) {
    %c0_i32 = arith.constant 0 : i32
    %c0_i32_0 = arith.constant 0 : i32
    %c0_i32_1 = arith.constant 0 : i32
    return %c0_i32, %c0_i32_0 : i32, i32
  }
  func.func @transform_4(%arg0: i32) -> (i32, i32) {
    %c0_i32 = arith.constant 0 : i32
    %c0_i32_0 = arith.constant 0 : i32
    %c0_i32_1 = arith.constant 0 : i32
    return %c0_i32, %c0_i32_0 : i32, i32
  }
  func.func @transform_5(%arg0: i32) -> (i32, i32) {
    %c0_i32 = arith.constant 0 : i32
    %c0_i32_0 = arith.constant 0 : i32
    %c0_i32_1 = arith.constant 0 : i32
    return %c0_i32, %c0_i32_0 : i32, i32
  }
  func.func @transform_6(%arg0: i32) -> (i32, i32) {
    %c0_i32 = arith.constant 0 : i32
    %c0_i32_0 = arith.constant 0 : i32
    return %arg0, %c0_i32 : i32, i32
  }
}

</mosaic_0001>

<llo_original>
// kernel: tpu_custom_call.1
$region0: #{tpu_custom_call.1}
  #allocation0 [shape = 'u32[]', space=smem, size = 0x4, offset = 0x4, fixed_abs, tag = 'smem constant byte address 0x4 - core index']
  #allocation1 [shape = 'u32[144,128]{1,0:T(1,128)}', space=vmem, size = 0x12000, scoped, tag = 'internal scratch']
  %s0 = inlined_call_operand.vmem [shape: f32[512,6], index: 0, kind: input, shape index: {}]
  %s1 = inlined_call_operand.vmem [shape: f32[6,32], index: 1, kind: input, shape index: {}]
  %s2 = inlined_call_operand.vmem [shape: f32[32,32], index: 2, kind: input, shape index: {}]
  %s3 = inlined_call_operand.vmem [shape: f32[32,32], index: 3, kind: input, shape index: {}]
  %s4 = inlined_call_operand.vmem [shape: f32[32,9], index: 4, kind: input, shape index: {}]
  %s5 = inlined_call_operand.vmem [shape: f32[4,32], index: 5, kind: input, shape index: {}]
  %s6 = inlined_call_operand.vmem [shape: f32[512,9], index: 6, kind: output, shape index: {}]
  %s7 = sld [smem:[#allocation0]]
  $region57: #{tpu_custom_call.1} parent=0
    _
  %s9 = ssub.s32 1, %s7
  %s10 = scalar_select 0, %s9, %s7
  loop: start=0, step=1, limit=4
  $region2: #{tpu_custom_call.1} parent=0 // loop_pre_header
    _
  $region3: #{tpu_custom_call.1} parent=0 // loop_header
    %s12 = sphi 0, %s16
    %p13 = scmp.ge.s32.totalorder %s12, 4
    %s22 = sphi 0, %s24
    %s25 = sphi 0, %s22
    %s26 = sphi 0, %s25
    %s42 = sphi 0, %s26
    %s46 = sphi 0, %s46
    %s48 = sphi 0, %s46
    %s49 = sphi 0, %s48
    %s63 = sphi 0, %s49
    %s67 = sphi 0, %s67
    %s69 = sphi 0, %s67
    %s70 = sphi 0, %s69
    %s84 = sphi 0, %s70
    %s88 = sphi 0, %s88
    %s90 = sphi 0, %s88
    %s91 = sphi 0, %s90
    %s105 = sphi 0, %s91
    %s109 = sphi 0, %s109
    %s111 = sphi 0, %s109
    %s112 = sphi 0, %s111
    %s126 = sphi 0, %s112
    %s130 = sphi 0, %s130
    %s132 = sphi 0, %s130
    %s133 = sphi 0, %s132
    %s147 = sphi 0, %s133
    %s153 = sphi 0, %s155
    %s156 = sphi 0, %s153
    %s157 = sphi 0, %s156
    %s173 = sphi 0, %s157
  $region4: #{tpu_custom_call.1} parent=0 // loop_header_branch
    %15 = sbr.rel (%p13) target = $region8
  $region5: #{tpu_custom_call.1} parent=0 // loop_body
    %s17 = ssub.s32 %s12, 1
    %s18 = ssub.s32 %s12, 2
    %s19 = sadd.s32 %s12, 1
    %s20 = ssub.s32 %s12, %s19
    %p21 = scmp.eq.s32.totalorder %s20, 0
    %s23 = sadd.s32 %s22, 1
    %s24 = scalar_select %p21, %s22, %s23
    %p27 = pneg %p21
    %p28 = scmp.eq.s32.totalorder %s12, 1
    %p29 = por %p27, %p28
    %p30 = scmp.ne.s32.totalorder %s22, %s25
    %p31 = scmp.eq.s32.totalorder %s12, 0
    %p32 = por %p30, %p31
    %p33 = scmp.ne.s32.totalorder %s22, %s25
    %p34 = scmp.eq.s32.totalorder %s17, 1
    %p35 = por %p33, %p34
    %p36 = scmp.ne.s32.totalorder %s25, %s26
    %p37 = scmp.eq.s32.totalorder %s17, 0
    %p38 = por %p36, %p37
    %p39 = scmp.ne.s32.totalorder %s25, %s26
    %p40 = scmp.eq.s32.totalorder %s18, 1
    %p41 = por %p39, %p40
    %p43 = scmp.ne.s32.totalorder %s26, %s42
    %p44 = scmp.eq.s32.totalorder %s18, 0
    %p45 = por %p43, %p44
    %s47 = sadd.s32 %s46, 1
    %p50 = scmp.eq.s32.totalorder %s12, 1
    %p51 = scmp.ne.s32.totalorder %s46, %s48
    %p52 = scmp.eq.s32.totalorder %s12, 0
    %p53 = por %p51, %p52
    %p54 = scmp.ne.s32.totalorder %s46, %s48
    %p55 = scmp.eq.s32.totalorder %s17, 1
    %p56 = por %p54, %p55
    %p57 = scmp.ne.s32.totalorder %s48, %s49
    %p58 = scmp.eq.s32.totalorder %s17, 0
    %p59 = por %p57, %p58
    %p60 = scmp.ne.s32.totalorder %s48, %s49
    %p61 = scmp.eq.s32.totalorder %s18, 1
    %p62 = por %p60, %p61
    %p64 = scmp.ne.s32.totalorder %s49, %s63
    %p65 = scmp.eq.s32.totalorder %s18, 0
    %p66 = por %p64, %p65
    %s68 = sadd.s32 %s67, 1
    %p71 = scmp.eq.s32.totalorder %s12, 1
    %p72 = scmp.ne.s32.totalorder %s67, %s69
    %p73 = scmp.eq.s32.totalorder %s12, 0
    %p74 = por %p72, %p73
    %p75 = scmp.ne.s32.totalorder %s67, %s69
    %p76 = scmp.eq.s32.totalorder %s17, 1
    %p77 = por %p75, %p76
    %p78 = scmp.ne.s32.totalorder %s69, %s70
    %p79 = scmp.eq.s32.totalorder %s17, 0
    %p80 = por %p78, %p79
    %p81 = scmp.ne.s32.totalorder %s69, %s70
    %p82 = scmp.eq.s32.totalorder %s18, 1
    %p83 = por %p81, %p82
    %p85 = scmp.ne.s32.totalorder %s70, %s84
    %p86 = scmp.eq.s32.totalorder %s18, 0
    %p87 = por %p85, %p86
    %s89 = sadd.s32 %s88, 1
    %p92 = scmp.eq.s32.totalorder %s12, 1
    %p93 = scmp.ne.s32.totalorder %s88, %s90
    %p94 = scmp.eq.s32.totalorder %s12, 0
    %p95 = por %p93, %p94
    %p96 = scmp.ne.s32.totalorder %s88, %s90
    %p97 = scmp.eq.s32.totalorder %s17, 1
    %p98 = por %p96, %p97
    %p99 = scmp.ne.s32.totalorder %s90, %s91
    %p100 = scmp.eq.s32.totalorder %s17, 0
    %p101 = por %p99, %p100
    %p102 = scmp.ne.s32.totalorder %s90, %s91
    %p103 = scmp.eq.s32.totalorder %s18, 1
    %p104 = por %p102, %p103
    %p106 = scmp.ne.s32.totalorder %s91, %s105
    %p107 = scmp.eq.s32.totalorder %s18, 0
    %p108 = por %p106, %p107
    %s110 = sadd.s32 %s109, 1
    %p113 = scmp.eq.s32.totalorder %s12, 1
    %p114 = scmp.ne.s32.totalorder %s109, %s111
    %p115 = scmp.eq.s32.totalorder %s12, 0
    %p116 = por %p114, %p115
    %p117 = scmp.ne.s32.totalorder %s109, %s111
    %p118 = scmp.eq.s32.totalorder %s17, 1
    %p119 = por %p117, %p118
    %p120 = scmp.ne.s32.totalorder %s111, %s112
    %p121 = scmp.eq.s32.totalorder %s17, 0
    %p122 = por %p120, %p121
    %p123 = scmp.ne.s32.totalorder %s111, %s112
    %p124 = scmp.eq.s32.totalorder %s18, 1
    %p125 = por %p123, %p124
    %p127 = scmp.ne.s32.totalorder %s112, %s126
    %p128 = scmp.eq.s32.totalorder %s18, 0
    %p129 = por %p127, %p128
    %s131 = sadd.s32 %s130, 1
    %p134 = scmp.eq.s32.totalorder %s12, 1
    %p135 = scmp.ne.s32.totalorder %s130, %s132
    %p136 = scmp.eq.s32.totalorder %s12, 0
    %p137 = por %p135, %p136
    %p138 = scmp.ne.s32.totalorder %s130, %s132
    %p139 = scmp.eq.s32.totalorder %s17, 1
    %p140 = por %p138, %p139
    %p141 = scmp.ne.s32.totalorder %s132, %s133
    %p142 = scmp.eq.s32.totalorder %s17, 0
    %p143 = por %p141, %p142
    %p144 = scmp.ne.s32.totalorder %s132, %s133
    %p145 = scmp.eq.s32.totalorder %s18, 1
    %p146 = por %p144, %p145
    %p148 = scmp.ne.s32.totalorder %s133, %s147
    %p149 = scmp.eq.s32.totalorder %s18, 0
    %p150 = por %p148, %p149
    %s151 = ssub.s32 %s12, %s19
    %p152 = scmp.eq.s32.totalorder %s151, 0
    %s154 = sadd.s32 %s153, 1
    %s155 = scalar_select %p152, %s153, %s154
    %p158 = pneg %p152
    %p159 = scmp.eq.s32.totalorder %s12, 1
    %p160 = por %p158, %p159
    %p161 = scmp.ne.s32.totalorder %s153, %s156
    %p162 = scmp.eq.s32.totalorder %s12, 0
    %p163 = por %p161, %p162
    %p164 = scmp.ne.s32.totalorder %s153, %s156
    %p165 = scmp.eq.s32.totalorder %s17, 1
    %p166 = por %p164, %p165
    %p167 = scmp.ne.s32.totalorder %s156, %s157
    %p168 = scmp.eq.s32.totalorder %s17, 0
    %p169 = por %p167, %p168
    %p170 = scmp.ne.s32.totalorder %s156, %s157
    %p171 = scmp.eq.s32.totalorder %s18, 1
    %p172 = por %p170, %p171
    %p174 = scmp.ne.s32.totalorder %s157, %s173
    %p175 = scmp.eq.s32.totalorder %s18, 0
    %p176 = por %p174, %p175
    %p177 = scmp.le.s32.totalorder 1, %s12
    %p178 = scmp.lt.s32.totalorder %s12, 3
    %p179 = pnand %p177, %p178
    %p180 = pneg %p179
    // Predicated region
    $region9: #{tpu_custom_call.1} parent=5 // pred_check
      _
    $region10: #{tpu_custom_call.1} parent=5 // pred_check_branch
      %182 = sbr.rel (%p179) target = $region12
    $region11: #{tpu_custom_call.1} parent=5 // pred_region
      %s183 = ssub.s32 %s12, 1
      // Predicated region
      $region13: #{tpu_custom_call.1} parent=11 // pred_check
        %p184 = pneg %p59
      $region14: #{tpu_custom_call.1} parent=11 // pred_check_branch
        %186 = sbr.rel (%p184) target = $region16
      $region15: #{tpu_custom_call.1} parent=11 // pred_region
        _
      $region16: #{tpu_custom_call.1} parent=11 // pred_fallthru
        _
      // Predicated region
      $region17: #{tpu_custom_call.1} parent=11 // pred_check
        %p187 = pneg %p80
      $region18: #{tpu_custom_call.1} parent=11 // pred_check_branch
        %189 = sbr.rel (%p187) target = $region20
      $region19: #{tpu_custom_call.1} parent=11 // pred_region
        _
      $region20: #{tpu_custom_call.1} parent=11 // pred_fallthru
        _
      // Predicated region
      $region21: #{tpu_custom_call.1} parent=11 // pred_check
        %p190 = pneg %p101
      $region22: #{tpu_custom_call.1} parent=11 // pred_check_branch
        %192 = sbr.rel (%p190) target = $region24
      $region23: #{tpu_custom_call.1} parent=11 // pred_region
        _
      $region24: #{tpu_custom_call.1} parent=11 // pred_fallthru
        _
      // Predicated region
      $region25: #{tpu_custom_call.1} parent=11 // pred_check
        %p193 = pneg %p122
      $region26: #{tpu_custom_call.1} parent=11 // pred_check_branch
        %195 = sbr.rel (%p193) target = $region28
      $region27: #{tpu_custom_call.1} parent=11 // pred_region
        _
      $region28: #{tpu_custom_call.1} parent=11 // pred_fallthru
        _
      // Predicated region
      $region29: #{tpu_custom_call.1} parent=11 // pred_check
        %p196 = pneg %p143
      $region30: #{tpu_custom_call.1} parent=11 // pred_check_branch
        %198 = sbr.rel (%p196) target = $region32
      $region31: #{tpu_custom_call.1} parent=11 // pred_region
        _
      $region32: #{tpu_custom_call.1} parent=11 // pred_fallthru
        _
    $region12: #{tpu_custom_call.1} parent=5 // pred_fallthru
      _
    %p199 = scmp.lt.s32.totalorder %s12, 2
    // Predicated region
    $region33: #{tpu_custom_call.1} parent=5 // pred_check
      %p200 = pneg %p199
    $region34: #{tpu_custom_call.1} parent=5 // pred_check_branch
      %202 = sbr.rel (%p200) target = $region36
    $region35: #{tpu_custom_call.1} parent=5 // pred_region
      // Predicated region
      $region37: #{tpu_custom_call.1} parent=35 // pred_check
        %p203 = pneg %p32
      $region38: #{tpu_custom_call.1} parent=35 // pred_check_branch
        %205 = sbr.rel (%p203) target = $region40
      $region39: #{tpu_custom_call.1} parent=35 // pred_region
        %s206 = smul.u32 32, %s12
        %p207 = scmp.lt.s32.totalorder %s206, 63
        %s208 = scalar_select %p207, %s206, 63
        %s209 = smul.addr %s208, 8
        %s210 = scalar_lea.vmem %s0, %s209
        %s211 = smul.u32 32, %s12
      $region40: #{tpu_custom_call.1} parent=35 // pred_fallthru
        _
    $region36: #{tpu_custom_call.1} parent=5 // pred_fallthru
      _
    %p212 = scmp.le.s32.totalorder 1, %s12
    %p213 = scmp.lt.s32.totalorder %s12, 3
    %p214 = pnand %p212, %p213
    %p215 = pneg %p214
    // Predicated region
    $region41: #{tpu_custom_call.1} parent=5 // pred_check
      _
    $region42: #{tpu_custom_call.1} parent=5 // pred_check_branch
      %217 = sbr.rel (%p214) target = $region44
    $region43: #{tpu_custom_call.1} parent=5 // pred_region
      %s218 = ssub.s32 %s12, 1
      %s219 = smul.u32 32, %s17
      %p220 = scmp.lt.s32.totalorder %s219, 63
      %s221 = scalar_select %p220, %s219, 63
      %s222 = smul.addr %s221, 8
      %s223 = scalar_lea.vmem %s0, %s222
      %p224 = pneg %p38
      %p225 = pneg %p35
      %p226 = pneg %p59
      %p227 = pneg %p56
      %p228 = pneg %p80
      %p229 = pneg %p77
      %p230 = pneg %p101
      %p231 = pneg %p98
      %p232 = pneg %p122
      %p233 = pneg %p119
      %p234 = pneg %p143
      %p235 = pneg %p140
      %p236 = pneg %p169
      %p237 = pneg %p166
      %s238 = smul.u32 32, %s17
      %p239 = scmp.lt.s32.totalorder %s238, 63
      %s240 = scalar_select %p239, %s238, 63
      %s241 = smul.addr %s240, 8
      %s242 = scalar_lea.vmem %s6, %s241
      %s243 = smul.u32 32, %s17
      %p244 = scmp.lt.s32.totalorder %s243, 63
      %s245 = scalar_select %p244, %s243, 63
      %s246 = smul.addr %s245, 8
      %s247 = scalar_lea.vmem %s0, %s246
      %s248 = smul.u32 32, %s17
      %s249 = smul.u32 32, %s17
      %p250 = scmp.lt.s32.totalorder %s249, 63
      %s251 = scalar_select %p250, %s249, 63
      %s252 = smul.addr %s251, 8
      %s253 = scalar_lea.vmem %s6, %s252
      %s254 = smul.u32 32, %s17
      %v255 = vld [vmem:[%s5] sm:$0xf]
      %v256 = vld [vmem:[%s247] sm:$0xff]
      %v257 = vld [vmem:[%s247 + $0x8] sm:$0xff]
      %v258 = vld [vmem:[%s247 + $0x10] sm:$0xff]
      %v259 = vld [vmem:[%s247 + $0x18] sm:$0xff]
      %v260 = vld [vmem:[%s247 + $0x20] sm:$0xff]
      %v261 = vld [vmem:[%s247 + $0x28] sm:$0xff]
      %v262 = vld [vmem:[%s247 + $0x30] sm:$0xff]
      %v263 = vld [vmem:[%s247 + $0x38] sm:$0xff]
      %v264 = vld [vmem:[%s247 + $0x40] sm:$0xff]
      %v265 = vld [vmem:[%s247 + $0x48] sm:$0xff]
      %v266 = vld [vmem:[%s247 + $0x50] sm:$0xff]
      %v267 = vld [vmem:[%s247 + $0x58] sm:$0xff]
      %v268 = vld [vmem:[%s247 + $0x60] sm:$0xff]
      %v269 = vld [vmem:[%s247 + $0x68] sm:$0xff]
      %v270 = vld [vmem:[%s247 + $0x70] sm:$0xff]
      %v271 = vld [vmem:[%s247 + $0x78] sm:$0xff]
      %v272 = vld [vmem:[%s247 + $0x80] sm:$0xff]
      %v273 = vld [vmem:[%s247 + $0x88] sm:$0xff]
      %v274 = vld [vmem:[%s247 + $0x90] sm:$0xff]
      %v275 = vld [vmem:[%s247 + $0x98] sm:$0xff]
      %v276 = vld [vmem:[%s247 + $0xa0] sm:$0xff]
      %v277 = vld [vmem:[%s247 + $0xa8] sm:$0xff]
      %v278 = vld [vmem:[%s247 + $0xb0] sm:$0xff]
      %v279 = vld [vmem:[%s247 + $0xb8] sm:$0xff]
      %v280 = vld [vmem:[%s247 + $0xc0] sm:$0xff]
      %v281 = vld [vmem:[%s247 + $0xc8] sm:$0xff]
      %v282 = vld [vmem:[%s247 + $0xd0] sm:$0xff]
      %v283 = vld [vmem:[%s247 + $0xd8] sm:$0xff]
      %v284 = vld [vmem:[%s247 + $0xe0] sm:$0xff]
      %v285 = vld [vmem:[%s247 + $0xe8] sm:$0xff]
      %v286 = vld [vmem:[%s247 + $0xf0] sm:$0xff]
      %v287 = vld [vmem:[%s247 + $0xf8] sm:$0xff]
      %v288 = vld [vmem:[%s1] sm:$0x3f]
      %v289 = vlaneseq
      %v290 = vshrl.u32 %v289, 7
      %v291 = vsub.s32 0, %v290
      %v292 = vrot.slane %v255, %v291
      %vm293 = vcmask 48128
      %v295 = vsel %vm293, %v256, 0
      %v298 = vsel %vm293, %v257, 0
      %v301 = vsel %vm293, %v258, 0
      %v304 = vsel %vm293, %v259, 0
      %v307 = vsel %vm293, %v260, 0
      %v310 = vsel %vm293, %v261, 0
      %v313 = vsel %vm293, %v262, 0
      %v316 = vsel %vm293, %v263, 0
      %v319 = vsel %vm293, %v264, 0
      %v322 = vsel %vm293, %v265, 0
      %v325 = vsel %vm293, %v266, 0
      %v328 = vsel %vm293, %v267, 0
      %v331 = vsel %vm293, %v268, 0
      %v334 = vsel %vm293, %v269, 0
      %v337 = vsel %vm293, %v270, 0
      %v340 = vsel %vm293, %v271, 0
      %v343 = vsel %vm293, %v272, 0
      %v346 = vsel %vm293, %v273, 0
      %v349 = vsel %vm293, %v274, 0
      %v352 = vsel %vm293, %v275, 0
      %v355 = vsel %vm293, %v276, 0
      %v358 = vsel %vm293, %v277, 0
      %v361 = vsel %vm293, %v278, 0
      %v364 = vsel %vm293, %v279, 0
      %v367 = vsel %vm293, %v280, 0
      %v370 = vsel %vm293, %v281, 0
      %v373 = vsel %vm293, %v282, 0
      %v376 = vsel %vm293, %v283, 0
      %v379 = vsel %vm293, %v284, 0
      %v382 = vsel %vm293, %v285, 0
      %v385 = vsel %vm293, %v286, 0
      %v388 = vsel %vm293, %v287, 0
      %vm390 = vcmask 1045504
      %v392 = vsel %vm390, %v288, 0
      %394 = vmatprep.subr.mxu0 0.0
      %395 = vmatpush1.msra.mxu0 0.0
      %396 = vmatprep.subr.mxu0 0.0
      %397 = vmatpush1.msra.mxu0 0.0
      %398 = vmatprep.subr.mxu0 0.0
      %399 = vmatpush1.msra.mxu0 0.0
      %400 = vmatprep.subr.mxu0 0.0
      %401 = vmatpush1.msra.mxu0 0.0
      %402 = vmatprep.subr.mxu0 0.0
      %403 = vmatpush1.msra.mxu0 0.0
      %404 = vmatprep.subr.mxu0 0.0
      %405 = vmatpush1.msra.mxu0 0.0
      %406 = vmatprep.subr.mxu0 0.0
      %407 = vmatpush1.msra.mxu0 0.0
      %408 = vmatprep.subr.mxu0 0.0
      %409 = vmatpush1.msra.mxu0 0.0
      %410 = vmatprep.subr.mxu0 0.0
      %411 = vmatpush1.msra.mxu0 0.0
      %412 = vmatprep.subr.mxu0 0.0
      %413 = vmatpush1.msra.mxu0 0.0
      %414 = vmatprep.subr.mxu0 0.0
      %415 = vmatpush1.msra.mxu0 0.0
      %416 = vmatprep.subr.mxu0 0.0
      %417 = vmatpush1.msra.mxu0 0.0
      %418 = vmatprep.subr.mxu0 0.0
      %419 = vmatpush1.msra.mxu0 0.0
      %420 = vmatprep.subr.mxu0 0.0
      %421 = vmatpush1.msra.mxu0 0.0
      %422 = vmatprep.subr.mxu0 0.0
      %423 = vmatpush1.msra.mxu0 0.0
      %424 = vmatprep.subr.mxu0 0.0
      %425 = vmatpush1.msra.mxu0 %v392
      %426 = vmatprep.subr.mxu0 0.0
      %427 = vmatpush2.msra.mxu0 0.0
      %428 = vmatprep.subr.mxu0 0.0
      %429 = vmatpush2.msra.mxu0 0.0
      %430 = vmatprep.subr.mxu0 0.0
      %431 = vmatpush2.msra.mxu0 0.0
      %432 = vmatprep.subr.mxu0 0.0
      %433 = vmatpush2.msra.mxu0 0.0
      %434 = vmatprep.subr.mxu0 0.0
      %435 = vmatpush2.msra.mxu0 0.0
      %436 = vmatprep.subr.mxu0 0.0
      %437 = vmatpush2.msra.mxu0 0.0
      %438 = vmatprep.subr.mxu0 0.0
      %439 = vmatpush2.msra.mxu0 0.0
      %440 = vmatprep.subr.mxu0 0.0
      %441 = vmatpush2.msra.mxu0 0.0
      %442 = vmatprep.subr.mxu0 0.0
      %443 = vmatpush2.msra.mxu0 0.0
      %444 = vmatprep.subr.mxu0 0.0
      %445 = vmatpush2.msra.mxu0 0.0
      %446 = vmatprep.subr.mxu0 0.0
      %447 = vmatpush2.msra.mxu0 0.0
      %448 = vmatprep.subr.mxu0 0.0
      %449 = vmatpush2.msra.mxu0 0.0
      %450 = vmatprep.subr.mxu0 0.0
      %451 = vmatpush2.msra.mxu0 0.0
      %452 = vmatprep.subr.mxu0 0.0
      %453 = vmatpush2.msra.mxu0 0.0
      %454 = vmatprep.subr.mxu0 0.0
      %455 = vmatpush2.msra.mxu0 0.0
      %456 = vmatprep.subr.mxu0 0.0
      %457 = vmatpush2.msra.mxu0 0.0
      %458 = vmatprep.mubr.f32.mxu0 0.0
      %459 = vmatmul.mubr.f32.gmra.mxu0 %v295
      %v460 = vpop.f32.mrf.mxu0
      %v461 = vadd.f32 %v292, %v460
      %v462 = vpop.f32.mrf.mxu0
      %463 = vmatprep.mubr.f32.mxu0 0.0
      %464 = vmatmul.mubr.f32.gmra.mxu0 %v298
      %v465 = vpop.f32.mrf.mxu0
      %v466 = vadd.f32 %v292, %v465
      %v467 = vpop.f32.mrf.mxu0
      %468 = vmatprep.mubr.f32.mxu0 0.0
      %469 = vmatmul.mubr.f32.gmra.mxu0 %v301
      %v470 = vpop.f32.mrf.mxu0
      %v471 = vadd.f32 %v292, %v470
      %v472 = vpop.f32.mrf.mxu0
      %473 = vmatprep.mubr.f32.mxu0 0.0
      %474 = vmatmul.mubr.f32.gmra.mxu0 %v304
      %v475 = vpop.f32.mrf.mxu0
      %v476 = vadd.f32 %v292, %v475
      %v477 = vpop.f32.mrf.mxu0
      %478 = vmatprep.mubr.f32.mxu0 0.0
      %479 = vmatmul.mubr.f32.gmra.mxu0 %v307
      %v480 = vpop.f32.mrf.mxu0
      %v481 = vadd.f32 %v292, %v480
      %v482 = vpop.f32.mrf.mxu0
      %483 = vmatprep.mubr.f32.mxu0 0.0
      %484 = vmatmul.mubr.f32.gmra.mxu0 %v310
      %v485 = vpop.f32.mrf.mxu0
      %v486 = vadd.f32 %v292, %v485
      %v487 = vpop.f32.mrf.mxu0
      %488 = vmatprep.mubr.f32.mxu0 0.0
      %489 = vmatmul.mubr.f32.gmra.mxu0 %v313
      %v490 = vpop.f32.mrf.mxu0
      %v491 = vadd.f32 %v292, %v490
      %v492 = vpop.f32.mrf.mxu0
      %493 = vmatprep.mubr.f32.mxu0 0.0
      %494 = vmatmul.mubr.f32.gmra.mxu0 %v316
      %v495 = vpop.f32.mrf.mxu0
      %v496 = vadd.f32 %v292, %v495
      %v497 = vpop.f32.mrf.mxu0
      %498 = vmatprep.mubr.f32.mxu0 0.0
      %499 = vmatmul.mubr.f32.gmra.mxu0 %v319
      %v500 = vpop.f32.mrf.mxu0
      %v501 = vadd.f32 %v292, %v500
      %v502 = vpop.f32.mrf.mxu0
      %503 = vmatprep.mubr.f32.mxu0 0.0
      %504 = vmatmul.mubr.f32.gmra.mxu0 %v322
      %v505 = vpop.f32.mrf.mxu0
      %v506 = vadd.f32 %v292, %v505
      %v507 = vpop.f32.mrf.mxu0
      %508 = vmatprep.mubr.f32.mxu0 0.0
      %509 = vmatmul.mubr.f32.gmra.mxu0 %v325
      %v510 = vpop.f32.mrf.mxu0
      %v511 = vadd.f32 %v292, %v510
      %v512 = vpop.f32.mrf.mxu0
      %513 = vmatprep.mubr.f32.mxu0 0.0
      %514 = vmatmul.mubr.f32.gmra.mxu0 %v328
      %v515 = vpop.f32.mrf.mxu0
      %v516 = vadd.f32 %v292, %v515
      %v517 = vpop.f32.mrf.mxu0
      %518 = vmatprep.mubr.f32.mxu0 0.0
      %519 = vmatmul.mubr.f32.gmra.mxu0 %v331
      %v520 = vpop.f32.mrf.mxu0
      %v521 = vadd.f32 %v292, %v520
      %v522 = vpop.f32.mrf.mxu0
      %523 = vmatprep.mubr.f32.mxu0 0.0
      %524 = vmatmul.mubr.f32.gmra.mxu0 %v334
      %v525 = vpop.f32.mrf.mxu0
      %v526 = vadd.f32 %v292, %v525
      %v527 = vpop.f32.mrf.mxu0
      %528 = vmatprep.mubr.f32.mxu0 0.0
      %529 = vmatmul.mubr.f32.gmra.mxu0 %v337
      %v530 = vpop.f32.mrf.mxu0
      %v531 = vadd.f32 %v292, %v530
      %v532 = vpop.f32.mrf.mxu0
      %533 = vmatprep.mubr.f32.mxu0 0.0
      %534 = vmatmul.mubr.f32.gmra.mxu0 %v340
      %v535 = vpop.f32.mrf.mxu0
      %v536 = vadd.f32 %v292, %v535
      %v537 = vpop.f32.mrf.mxu0
      %538 = vmatprep.mubr.f32.mxu0 0.0
      %539 = vmatmul.mubr.f32.gmra.mxu0 %v343
      %v540 = vpop.f32.mrf.mxu0
      %v541 = vadd.f32 %v292, %v540
      %v542 = vpop.f32.mrf.mxu0
      %543 = vmatprep.mubr.f32.mxu0 0.0
      %544 = vmatmul.mubr.f32.gmra.mxu0 %v346
      %v545 = vpop.f32.mrf.mxu0
      %v546 = vadd.f32 %v292, %v545
      %v547 = vpop.f32.mrf.mxu0
      %548 = vmatprep.mubr.f32.mxu0 0.0
      %549 = vmatmul.mubr.f32.gmra.mxu0 %v349
      %v550 = vpop.f32.mrf.mxu0
      %v551 = vadd.f32 %v292, %v550
      %v552 = vpop.f32.mrf.mxu0
      %553 = vmatprep.mubr.f32.mxu0 0.0
      %554 = vmatmul.mubr.f32.gmra.mxu0 %v352
      %v555 = vpop.f32.mrf.mxu0
      %v556 = vadd.f32 %v292, %v555
      %v557 = vpop.f32.mrf.mxu0
      %558 = vmatprep.mubr.f32.mxu0 0.0
      %559 = vmatmul.mubr.f32.gmra.mxu0 %v355
      %v560 = vpop.f32.mrf.mxu0
      %v561 = vadd.f32 %v292, %v560
      %v562 = vpop.f32.mrf.mxu0
      %563 = vmatprep.mubr.f32.mxu0 0.0
      %564 = vmatmul.mubr.f32.gmra.mxu0 %v358
      %v565 = vpop.f32.mrf.mxu0
      %v566 = vadd.f32 %v292, %v565
      %v567 = vpop.f32.mrf.mxu0
      %568 = vmatprep.mubr.f32.mxu0 0.0
      %569 = vmatmul.mubr.f32.gmra.mxu0 %v361
      %v570 = vpop.f32.mrf.mxu0
      %v571 = vadd.f32 %v292, %v570
      %v572 = vpop.f32.mrf.mxu0
      %573 = vmatprep.mubr.f32.mxu0 0.0
      %574 = vmatmul.mubr.f32.gmra.mxu0 %v364
      %v575 = vpop.f32.mrf.mxu0
      %v576 = vadd.f32 %v292, %v575
      %v577 = vpop.f32.mrf.mxu0
      %578 = vmatprep.mubr.f32.mxu0 0.0
      %579 = vmatmul.mubr.f32.gmra.mxu0 %v367
      %v580 = vpop.f32.mrf.mxu0
      %v581 = vadd.f32 %v292, %v580
      %v582 = vpop.f32.mrf.mxu0
      %583 = vmatprep.mubr.f32.mxu0 0.0
      %584 = vmatmul.mubr.f32.gmra.mxu0 %v370
      %v585 = vpop.f32.mrf.mxu0
      %v586 = vadd.f32 %v292, %v585
      %v587 = vpop.f32.mrf.mxu0
      %588 = vmatprep.mubr.f32.mxu0 0.0
      %589 = vmatmul.mubr.f32.gmra.mxu0 %v373
      %v590 = vpop.f32.mrf.mxu0
      %v591 = vadd.f32 %v292, %v590
      %v592 = vpop.f32.mrf.mxu0
      %593 = vmatprep.mubr.f32.mxu0 0.0
      %594 = vmatmul.mubr.f32.gmra.mxu0 %v376
      %v595 = vpop.f32.mrf.mxu0
      %v596 = vadd.f32 %v292, %v595
      %v597 = vpop.f32.mrf.mxu0
      %598 = vmatprep.mubr.f32.mxu0 0.0
      %599 = vmatmul.mubr.f32.gmra.mxu0 %v379
      %v600 = vpop.f32.mrf.mxu0
      %v601 = vadd.f32 %v292, %v600
      %v602 = vpop.f32.mrf.mxu0
      %603 = vmatprep.mubr.f32.mxu0 0.0
      %604 = vmatmul.mubr.f32.gmra.mxu0 %v382
      %v605 = vpop.f32.mrf.mxu0
      %v606 = vadd.f32 %v292, %v605
      %v607 = vpop.f32.mrf.mxu0
      %608 = vmatprep.mubr.f32.mxu0 0.0
      %609 = vmatmul.mubr.f32.gmra.mxu0 %v385
      %v610 = vpop.f32.mrf.mxu0
      %v611 = vadd.f32 %v292, %v610
      %v612 = vpop.f32.mrf.mxu0
      %613 = vmatprep.mubr.f32.mxu0 0.0
      %614 = vmatmul.mubr.f32.gmra.mxu0 %v388
      %v615 = vpop.f32.mrf.mxu0
      %v616 = vadd.f32 %v292, %v615
      %v617 = vpop.f32.mrf.mxu0
      %618 = vdwg.mxu0
      %v619 = vmax.f32 %v461, 0.0
      %v620 = vmax.f32 %v466, 0.0
      %v621 = vmax.f32 %v471, 0.0
      %v622 = vmax.f32 %v476, 0.0
      %v623 = vmax.f32 %v481, 0.0
      %v624 = vmax.f32 %v486, 0.0
      %v625 = vmax.f32 %v491, 0.0
      %v626 = vmax.f32 %v496, 0.0
      %v627 = vmax.f32 %v501, 0.0
      %v628 = vmax.f32 %v506, 0.0
      %v629 = vmax.f32 %v511, 0.0
      %v630 = vmax.f32 %v516, 0.0
      %v631 = vmax.f32 %v521, 0.0
      %v632 = vmax.f32 %v526, 0.0
      %v633 = vmax.f32 %v531, 0.0
      %v634 = vmax.f32 %v536, 0.0
      %v635 = vmax.f32 %v541, 0.0
      %v636 = vmax.f32 %v546, 0.0
      %v637 = vmax.f32 %v551, 0.0
      %v638 = vmax.f32 %v556, 0.0
      %v639 = vmax.f32 %v561, 0.0
      %v640 = vmax.f32 %v566, 0.0
      %v641 = vmax.f32 %v571, 0.0
      %v642 = vmax.f32 %v576, 0.0
      %v643 = vmax.f32 %v581, 0.0
      %v644 = vmax.f32 %v586, 0.0
      %v645 = vmax.f32 %v591, 0.0
      %v646 = vmax.f32 %v596, 0.0
      %v647 = vmax.f32 %v601, 0.0
      %v648 = vmax.f32 %v606, 0.0
      %v649 = vmax.f32 %v611, 0.0
      %v650 = vmax.f32 %v616, 0.0
      %v651 = vld [vmem:[%s2] sm:$0xff]
      %v652 = vld [vmem:[%s2 + $0x8] sm:$0xff]
      %v653 = vld [vmem:[%s2 + $0x10] sm:$0xff]
      %v654 = vld [vmem:[%s2 + $0x18] sm:$0xff]
      %v655 = vlaneseq
      %v656 = vshrl.u32 %v655, 7
      %v657 = vsub.s32 1, %v656
      %v658 = vrot.slane %v255, %v657
      %vm659 = vcmask 261120
      %v661 = vsel %vm659, %v619, 0
      %v664 = vsel %vm659, %v620, 0
      %v667 = vsel %vm659, %v621, 0
      %v670 = vsel %vm659, %v622, 0
      %v673 = vsel %vm659, %v623, 0
      %v676 = vsel %vm659, %v624, 0
      %v679 = vsel %vm659, %v625, 0
      %v682 = vsel %vm659, %v626, 0
      %v685 = vsel %vm659, %v627, 0
      %v688 = vsel %vm659, %v628, 0
      %v691 = vsel %vm659, %v629, 0
      %v694 = vsel %vm659, %v630, 0
      %v697 = vsel %vm659, %v631, 0
      %v700 = vsel %vm659, %v632, 0
      %v703 = vsel %vm659, %v633, 0
      %v706 = vsel %vm659, %v634, 0
      %v709 = vsel %vm659, %v635, 0
      %v712 = vsel %vm659, %v636, 0
      %v715 = vsel %vm659, %v637, 0
      %v718 = vsel %vm659, %v638, 0
      %v721 = vsel %vm659, %v639, 0
      %v724 = vsel %vm659, %v640, 0
      %v727 = vsel %vm659, %v641, 0
      %v730 = vsel %vm659, %v642, 0
      %v733 = vsel %vm659, %v643, 0
      %v736 = vsel %vm659, %v644, 0
      %v739 = vsel %vm659, %v645, 0
      %v742 = vsel %vm659, %v646, 0
      %v745 = vsel %vm659, %v647, 0
      %v748 = vsel %vm659, %v648, 0
      %v751 = vsel %vm659, %v649, 0
      %v754 = vsel %vm659, %v650, 0
      %756 = vmatprep.subr.mxu0 0.0
      %757 = vmatpush1.msra.mxu0 0.0
      %758 = vmatprep.subr.mxu0 0.0
      %759 = vmatpush1.msra.mxu0 0.0
      %760 = vmatprep.subr.mxu0 0.0
      %761 = vmatpush1.msra.mxu0 0.0
      %762 = vmatprep.subr.mxu0 0.0
      %763 = vmatpush1.msra.mxu0 0.0
      %764 = vmatprep.subr.mxu0 0.0
      %765 = vmatpush1.msra.mxu0 0.0
      %766 = vmatprep.subr.mxu0 0.0
      %767 = vmatpush1.msra.mxu0 0.0
      %768 = vmatprep.subr.mxu0 0.0
      %769 = vmatpush1.msra.mxu0 0.0
      %770 = vmatprep.subr.mxu0 0.0
      %771 = vmatpush1.msra.mxu0 0.0
      %772 = vmatprep.subr.mxu0 0.0
      %773 = vmatpush1.msra.mxu0 0.0
      %774 = vmatprep.subr.mxu0 0.0
      %775 = vmatpush1.msra.mxu0 0.0
      %776 = vmatprep.subr.mxu0 0.0
      %777 = vmatpush1.msra.mxu0 0.0
      %778 = vmatprep.subr.mxu0 0.0
      %779 = vmatpush1.msra.mxu0 0.0
      %780 = vmatprep.subr.mxu0 0.0
      %781 = vmatpush1.msra.mxu0 %v654
      %782 = vmatprep.subr.mxu0 0.0
      %783 = vmatpush1.msra.mxu0 %v653
      %784 = vmatprep.subr.mxu0 0.0
      %785 = vmatpush1.msra.mxu0 %v652
      %786 = vmatprep.subr.mxu0 0.0
      %787 = vmatpush1.msra.mxu0 %v651
      %788 = vmatprep.subr.mxu0 0.0
      %789 = vmatpush2.msra.mxu0 0.0
      %790 = vmatprep.subr.mxu0 0.0
      %791 = vmatpush2.msra.mxu0 0.0
      %792 = vmatprep.subr.mxu0 0.0
      %793 = vmatpush2.msra.mxu0 0.0
      %794 = vmatprep.subr.mxu0 0.0
      %795 = vmatpush2.msra.mxu0 0.0
      %796 = vmatprep.subr.mxu0 0.0
      %797 = vmatpush2.msra.mxu0 0.0
      %798 = vmatprep.subr.mxu0 0.0
      %799 = vmatpush2.msra.mxu0 0.0
      %800 = vmatprep.subr.mxu0 0.0
      %801 = vmatpush2.msra.mxu0 0.0
      %802 = vmatprep.subr.mxu0 0.0
      %803 = vmatpush2.msra.mxu0 0.0
      %804 = vmatprep.subr.mxu0 0.0
      %805 = vmatpush2.msra.mxu0 0.0
      %806 = vmatprep.subr.mxu0 0.0
      %807 = vmatpush2.msra.mxu0 0.0
      %808 = vmatprep.subr.mxu0 0.0
      %809 = vmatpush2.msra.mxu0 0.0
      %810 = vmatprep.subr.mxu0 0.0
      %811 = vmatpush2.msra.mxu0 0.0
      %812 = vmatprep.subr.mxu0 0.0
      %813 = vmatpush2.msra.mxu0 0.0
      %814 = vmatprep.subr.mxu0 0.0
      %815 = vmatpush2.msra.mxu0 0.0
      %816 = vmatprep.subr.mxu0 0.0
      %817 = vmatpush2.msra.mxu0 0.0
      %818 = vmatprep.subr.mxu0 0.0
      %819 = vmatpush2.msra.mxu0 0.0
      %820 = vmatprep.mubr.f32.mxu0 0.0
      %821 = vmatmul.mubr.f32.gmra.mxu0 %v661
      %v822 = vpop.f32.mrf.mxu0
      %v823 = vadd.f32 %v658, %v822
      %v824 = vpop.f32.mrf.mxu0
      %825 = vmatprep.mubr.f32.mxu0 0.0
      %826 = vmatmul.mubr.f32.gmra.mxu0 %v664
      %v827 = vpop.f32.mrf.mxu0
      %v828 = vadd.f32 %v658, %v827
      %v829 = vpop.f32.mrf.mxu0
      %830 = vmatprep.mubr.f32.mxu0 0.0
      %831 = vmatmul.mubr.f32.gmra.mxu0 %v667
      %v832 = vpop.f32.mrf.mxu0
      %v833 = vadd.f32 %v658, %v832
      %v834 = vpop.f32.mrf.mxu0
      %835 = vmatprep.mubr.f32.mxu0 0.0
      %836 = vmatmul.mubr.f32.gmra.mxu0 %v670
      %v837 = vpop.f32.mrf.mxu0
      %v838 = vadd.f32 %v658, %v837
      %v839 = vpop.f32.mrf.mxu0
      %840 = vmatprep.mubr.f32.mxu0 0.0
      %841 = vmatmul.mubr.f32.gmra.mxu0 %v673
      %v842 = vpop.f32.mrf.mxu0
      %v843 = vadd.f32 %v658, %v842
      %v844 = vpop.f32.mrf.mxu0
      %845 = vmatprep.mubr.f32.mxu0 0.0
      %846 = vmatmul.mubr.f32.gmra.mxu0 %v676
      %v847 = vpop.f32.mrf.mxu0
      %v848 = vadd.f32 %v658, %v847
      %v849 = vpop.f32.mrf.mxu0
      %850 = vmatprep.mubr.f32.mxu0 0.0
      %851 = vmatmul.mubr.f32.gmra.mxu0 %v679
      %v852 = vpop.f32.mrf.mxu0
      %v853 = vadd.f32 %v658, %v852
      %v854 = vpop.f32.mrf.mxu0
      %855 = vmatprep.mubr.f32.mxu0 0.0
      %856 = vmatmul.mubr.f32.gmra.mxu0 %v682
      %v857 = vpop.f32.mrf.mxu0
      %v858 = vadd.f32 %v658, %v857
      %v859 = vpop.f32.mrf.mxu0
      %860 = vmatprep.mubr.f32.mxu0 0.0
      %861 = vmatmul.mubr.f32.gmra.mxu0 %v685
      %v862 = vpop.f32.mrf.mxu0
      %v863 = vadd.f32 %v658, %v862
      %v864 = vpop.f32.mrf.mxu0
      %865 = vmatprep.mubr.f32.mxu0 0.0
      %866 = vmatmul.mubr.f32.gmra.mxu0 %v688
      %v867 = vpop.f32.mrf.mxu0
      %v868 = vadd.f32 %v658, %v867
      %v869 = vpop.f32.mrf.mxu0
      %870 = vmatprep.mubr.f32.mxu0 0.0
      %871 = vmatmul.mubr.f32.gmra.mxu0 %v691
      %v872 = vpop.f32.mrf.mxu0
      %v873 = vadd.f32 %v658, %v872
      %v874 = vpop.f32.mrf.mxu0
      %875 = vmatprep.mubr.f32.mxu0 0.0
      %876 = vmatmul.mubr.f32.gmra.mxu0 %v694
      %v877 = vpop.f32.mrf.mxu0
      %v878 = vadd.f32 %v658, %v877
      %v879 = vpop.f32.mrf.mxu0
      %880 = vmatprep.mubr.f32.mxu0 0.0
      %881 = vmatmul.mubr.f32.gmra.mxu0 %v697
      %v882 = vpop.f32.mrf.mxu0
      %v883 = vadd.f32 %v658, %v882
      %v884 = vpop.f32.mrf.mxu0
      %885 = vmatprep.mubr.f32.mxu0 0.0
      %886 = vmatmul.mubr.f32.gmra.mxu0 %v700
      %v887 = vpop.f32.mrf.mxu0
      %v888 = vadd.f32 %v658, %v887
      %v889 = vpop.f32.mrf.mxu0
      %890 = vmatprep.mubr.f32.mxu0 0.0
      %891 = vmatmul.mubr.f32.gmra.mxu0 %v703
      %v892 = vpop.f32.mrf.mxu0
      %v893 = vadd.f32 %v658, %v892
      %v894 = vpop.f32.mrf.mxu0
      %895 = vmatprep.mubr.f32.mxu0 0.0
      %896 = vmatmul.mubr.f32.gmra.mxu0 %v706
      %v897 = vpop.f32.mrf.mxu0
      %v898 = vadd.f32 %v658, %v897
      %v899 = vpop.f32.mrf.mxu0
      %900 = vmatprep.mubr.f32.mxu0 0.0
      %901 = vmatmul.mubr.f32.gmra.mxu0 %v709
      %v902 = vpop.f32.mrf.mxu0
      %v903 = vadd.f32 %v658, %v902
      %v904 = vpop.f32.mrf.mxu0
      %905 = vmatprep.mubr.f32.mxu0 0.0
      %906 = vmatmul.mubr.f32.gmra.mxu0 %v712
      %v907 = vpop.f32.mrf.mxu0
      %v908 = vadd.f32 %v658, %v907
      %v909 = vpop.f32.mrf.mxu0
      %910 = vmatprep.mubr.f32.mxu0 0.0
      %911 = vmatmul.mubr.f32.gmra.mxu0 %v715
      %v912 = vpop.f32.mrf.mxu0
      %v913 = vadd.f32 %v658, %v912
      %v914 = vpop.f32.mrf.mxu0
      %915 = vmatprep.mubr.f32.mxu0 0.0
      %916 = vmatmul.mubr.f32.gmra.mxu0 %v718
      %v917 = vpop.f32.mrf.mxu0
      %v918 = vadd.f32 %v658, %v917
      %v919 = vpop.f32.mrf.mxu0
      %920 = vmatprep.mubr.f32.mxu0 0.0
      %921 = vmatmul.mubr.f32.gmra.mxu0 %v721
      %v922 = vpop.f32.mrf.mxu0
      %v923 = vadd.f32 %v658, %v922
      %v924 = vpop.f32.mrf.mxu0
      %925 = vmatprep.mubr.f32.mxu0 0.0
      %926 = vmatmul.mubr.f32.gmra.mxu0 %v724
      %v927 = vpop.f32.mrf.mxu0
      %v928 = vadd.f32 %v658, %v927
      %v929 = vpop.f32.mrf.mxu0
      %930 = vmatprep.mubr.f32.mxu0 0.0
      %931 = vmatmul.mubr.f32.gmra.mxu0 %v727
      %v932 = vpop.f32.mrf.mxu0
      %v933 = vadd.f32 %v658, %v932
      %v934 = vpop.f32.mrf.mxu0
      %935 = vmatprep.mubr.f32.mxu0 0.0
      %936 = vmatmul.mubr.f32.gmra.mxu0 %v730
      %v937 = vpop.f32.mrf.mxu0
      %v938 = vadd.f32 %v658, %v937
      %v939 = vpop.f32.mrf.mxu0
      %940 = vmatprep.mubr.f32.mxu0 0.0
      %941 = vmatmul.mubr.f32.gmra.mxu0 %v733
      %v942 = vpop.f32.mrf.mxu0
      %v943 = vadd.f32 %v658, %v942
      %v944 = vpop.f32.mrf.mxu0
      %945 = vmatprep.mubr.f32.mxu0 0.0
      %946 = vmatmul.mubr.f32.gmra.mxu0 %v736
      %v947 = vpop.f32.mrf.mxu0
      %v948 = vadd.f32 %v658, %v947
      %v949 = vpop.f32.mrf.mxu0
      %950 = vmatprep.mubr.f32.mxu0 0.0
      %951 = vmatmul.mubr.f32.gmra.mxu0 %v739
      %v952 = vpop.f32.mrf.mxu0
      %v953 = vadd.f32 %v658, %v952
      %v954 = vpop.f32.mrf.mxu0
      %955 = vmatprep.mubr.f32.mxu0 0.0
      %956 = vmatmul.mubr.f32.gmra.mxu0 %v742
      %v957 = vpop.f32.mrf.mxu0
      %v958 = vadd.f32 %v658, %v957
      %v959 = vpop.f32.mrf.mxu0
      %960 = vmatprep.mubr.f32.mxu0 0.0
      %961 = vmatmul.mubr.f32.gmra.mxu0 %v745
      %v962 = vpop.f32.mrf.mxu0
      %v963 = vadd.f32 %v658, %v962
      %v964 = vpop.f32.mrf.mxu0
      %965 = vmatprep.mubr.f32.mxu0 0.0
      %966 = vmatmul.mubr.f32.gmra.mxu0 %v748
      %v967 = vpop.f32.mrf.mxu0
      %v968 = vadd.f32 %v658, %v967
      %v969 = vpop.f32.mrf.mxu0
      %970 = vmatprep.mubr.f32.mxu0 0.0
      %971 = vmatmul.mubr.f32.gmra.mxu0 %v751
      %v972 = vpop.f32.mrf.mxu0
      %v973 = vadd.f32 %v658, %v972
      %v974 = vpop.f32.mrf.mxu0
      %975 = vmatprep.mubr.f32.mxu0 0.0
      %976 = vmatmul.mubr.f32.gmra.mxu0 %v754
      %v977 = vpop.f32.mrf.mxu0
      %v978 = vadd.f32 %v658, %v977
      %v979 = vpop.f32.mrf.mxu0
      %980 = vdwg.mxu0
      %v981 = vmax.f32 %v823, 0.0
      %v982 = vmax.f32 %v828, 0.0
      %v983 = vmax.f32 %v833, 0.0
      %v984 = vmax.f32 %v838, 0.0
      %v985 = vmax.f32 %v843, 0.0
      %v986 = vmax.f32 %v848, 0.0
      %v987 = vmax.f32 %v853, 0.0
      %v988 = vmax.f32 %v858, 0.0
      %v989 = vmax.f32 %v863, 0.0
      %v990 = vmax.f32 %v868, 0.0
      %v991 = vmax.f32 %v873, 0.0
      %v992 = vmax.f32 %v878, 0.0
      %v993 = vmax.f32 %v883, 0.0
      %v994 = vmax.f32 %v888, 0.0
      %v995 = vmax.f32 %v893, 0.0
      %v996 = vmax.f32 %v898, 0.0
      %v997 = vmax.f32 %v903, 0.0
      %v998 = vmax.f32 %v908, 0.0
      %v999 = vmax.f32 %v913, 0.0
      %v1000 = vmax.f32 %v918, 0.0
      %v1001 = vmax.f32 %v923, 0.0
      %v1002 = vmax.f32 %v928, 0.0
      %v1003 = vmax.f32 %v933, 0.0
      %v1004 = vmax.f32 %v938, 0.0
      %v1005 = vmax.f32 %v943, 0.0
      %v1006 = vmax.f32 %v948, 0.0
      %v1007 = vmax.f32 %v953, 0.0
      %v1008 = vmax.f32 %v958, 0.0
      %v1009 = vmax.f32 %v963, 0.0
      %v1010 = vmax.f32 %v968, 0.0
      %v1011 = vmax.f32 %v973, 0.0
      %v1012 = vmax.f32 %v978, 0.0
      %v1013 = vld [vmem:[%s3] sm:$0xff]
      %v1014 = vld [vmem:[%s3 + $0x8] sm:$0xff]
      %v1015 = vld [vmem:[%s3 + $0x10] sm:$0xff]
      %v1016 = vld [vmem:[%s3 + $0x18] sm:$0xff]
      %v1017 = vlaneseq
      %v1018 = vshrl.u32 %v1017, 7
      %v1019 = vsub.s32 2, %v1018
      %v1020 = vrot.slane %v255, %v1019
      %v1022 = vsel %vm659, %v981, 0
      %v1025 = vsel %vm659, %v982, 0
      %v1028 = vsel %vm659, %v983, 0
      %v1031 = vsel %vm659, %v984, 0
      %v1034 = vsel %vm659, %v985, 0
      %v1037 = vsel %vm659, %v986, 0
      %v1040 = vsel %vm659, %v987, 0
      %v1043 = vsel %vm659, %v988, 0
      %v1046 = vsel %vm659, %v989, 0
      %v1049 = vsel %vm659, %v990, 0
      %v1052 = vsel %vm659, %v991, 0
      %v1055 = vsel %vm659, %v992, 0
      %v1058 = vsel %vm659, %v993, 0
      %v1061 = vsel %vm659, %v994, 0
      %v1064 = vsel %vm659, %v995, 0
      %v1067 = vsel %vm659, %v996, 0
      %v1070 = vsel %vm659, %v997, 0
      %v1073 = vsel %vm659, %v998, 0
      %v1076 = vsel %vm659, %v999, 0
      %v1079 = vsel %vm659, %v1000, 0
      %v1082 = vsel %vm659, %v1001, 0
      %v1085 = vsel %vm659, %v1002, 0
      %v1088 = vsel %vm659, %v1003, 0
      %v1091 = vsel %vm659, %v1004, 0
      %v1094 = vsel %vm659, %v1005, 0
      %v1097 = vsel %vm659, %v1006, 0
      %v1100 = vsel %vm659, %v1007, 0
      %v1103 = vsel %vm659, %v1008, 0
      %v1106 = vsel %vm659, %v1009, 0
      %v1109 = vsel %vm659, %v1010, 0
      %v1112 = vsel %vm659, %v1011, 0
      %v1115 = vsel %vm659, %v1012, 0
      %1117 = vmatprep.subr.mxu0 0.0
      %1118 = vmatpush1.msra.mxu0 0.0
      %1119 = vmatprep.subr.mxu0 0.0
      %1120 = vmatpush1.msra.mxu0 0.0
      %1121 = vmatprep.subr.mxu0 0.0
      %1122 = vmatpush1.msra.mxu0 0.0
      %1123 = vmatprep.subr.mxu0 0.0
      %1124 = vmatpush1.msra.mxu0 0.0
      %1125 = vmatprep.subr.mxu0 0.0
      %1126 = vmatpush1.msra.mxu0 0.0
      %1127 = vmatprep.subr.mxu0 0.0
      %1128 = vmatpush1.msra.mxu0 0.0
      %1129 = vmatprep.subr.mxu0 0.0
      %1130 = vmatpush1.msra.mxu0 0.0
      %1131 = vmatprep.subr.mxu0 0.0
      %1132 = vmatpush1.msra.mxu0 0.0
      %1133 = vmatprep.subr.mxu0 0.0
      %1134 = vmatpush1.msra.mxu0 0.0
      %1135 = vmatprep.subr.mxu0 0.0
      %1136 = vmatpush1.msra.mxu0 0.0
      %1137 = vmatprep.subr.mxu0 0.0
      %1138 = vmatpush1.msra.mxu0 0.0
      %1139 = vmatprep.subr.mxu0 0.0
      %1140 = vmatpush1.msra.mxu0 0.0
      %1141 = vmatprep.subr.mxu0 0.0
      %1142 = vmatpush1.msra.mxu0 %v1016
      %1143 = vmatprep.subr.mxu0 0.0
      %1144 = vmatpush1.msra.mxu0 %v1015
      %1145 = vmatprep.subr.mxu0 0.0
      %1146 = vmatpush1.msra.mxu0 %v1014
      %1147 = vmatprep.subr.mxu0 0.0
      %1148 = vmatpush1.msra.mxu0 %v1013
      %1149 = vmatprep.subr.mxu0 0.0
      %1150 = vmatpush2.msra.mxu0 0.0
      %1151 = vmatprep.subr.mxu0 0.0
      %1152 = vmatpush2.msra.mxu0 0.0
      %1153 = vmatprep.subr.mxu0 0.0
      %1154 = vmatpush2.msra.mxu0 0.0
      %1155 = vmatprep.subr.mxu0 0.0
      %1156 = vmatpush2.msra.mxu0 0.0
      %1157 = vmatprep.subr.mxu0 0.0
      %1158 = vmatpush2.msra.mxu0 0.0
      %1159 = vmatprep.subr.mxu0 0.0
      %1160 = vmatpush2.msra.mxu0 0.0
      %1161 = vmatprep.subr.mxu0 0.0
      %1162 = vmatpush2.msra.mxu0 0.0
      %1163 = vmatprep.subr.mxu0 0.0
      %1164 = vmatpush2.msra.mxu0 0.0
      %1165 = vmatprep.subr.mxu0 0.0
      %1166 = vmatpush2.msra.mxu0 0.0
      %1167 = vmatprep.subr.mxu0 0.0
      %1168 = vmatpush2.msra.mxu0 0.0
      %1169 = vmatprep.subr.mxu0 0.0
      %1170 = vmatpush2.msra.mxu0 0.0
      %1171 = vmatprep.subr.mxu0 0.0
      %1172 = vmatpush2.msra.mxu0 0.0
      %1173 = vmatprep.subr.mxu0 0.0
      %1174 = vmatpush2.msra.mxu0 0.0
      %1175 = vmatprep.subr.mxu0 0.0
      %1176 = vmatpush2.msra.mxu0 0.0
      %1177 = vmatprep.subr.mxu0 0.0
      %1178 = vmatpush2.msra.mxu0 0.0
      %1179 = vmatprep.subr.mxu0 0.0
      %1180 = vmatpush2.msra.mxu0 0.0
      %1181 = vmatprep.mubr.f32.mxu0 0.0
      %1182 = vmatmul.mubr.f32.gmra.mxu0 %v1022
      %v1183 = vpop.f32.mrf.mxu0
      %v1184 = vadd.f32 %v1020, %v1183
      %v1185 = vpop.f32.mrf.mxu0
      %1186 = vmatprep.mubr.f32.mxu0 0.0
      %1187 = vmatmul.mubr.f32.gmra.mxu0 %v1025
      %v1188 = vpop.f32.mrf.mxu0
      %v1189 = vadd.f32 %v1020, %v1188
      %v1190 = vpop.f32.mrf.mxu0
      %1191 = vmatprep.mubr.f32.mxu0 0.0
      %1192 = vmatmul.mubr.f32.gmra.mxu0 %v1028
      %v1193 = vpop.f32.mrf.mxu0
      %v1194 = vadd.f32 %v1020, %v1193
      %v1195 = vpop.f32.mrf.mxu0
      %1196 = vmatprep.mubr.f32.mxu0 0.0
      %1197 = vmatmul.mubr.f32.gmra.mxu0 %v1031
      %v1198 = vpop.f32.mrf.mxu0
      %v1199 = vadd.f32 %v1020, %v1198
      %v1200 = vpop.f32.mrf.mxu0
      %1201 = vmatprep.mubr.f32.mxu0 0.0
      %1202 = vmatmul.mubr.f32.gmra.mxu0 %v1034
      %v1203 = vpop.f32.mrf.mxu0
      %v1204 = vadd.f32 %v1020, %v1203
      %v1205 = vpop.f32.mrf.mxu0
      %1206 = vmatprep.mubr.f32.mxu0 0.0
      %1207 = vmatmul.mubr.f32.gmra.mxu0 %v1037
      %v1208 = vpop.f32.mrf.mxu0
      %v1209 = vadd.f32 %v1020, %v1208
      %v1210 = vpop.f32.mrf.mxu0
      %1211 = vmatprep.mubr.f32.mxu0 0.0
      %1212 = vmatmul.mubr.f32.gmra.mxu0 %v1040
      %v1213 = vpop.f32.mrf.mxu0
      %v1214 = vadd.f32 %v1020, %v1213
      %v1215 = vpop.f32.mrf.mxu0
      %1216 = vmatprep.mubr.f32.mxu0 0.0
      %1217 = vmatmul.mubr.f32.gmra.mxu0 %v1043
      %v1218 = vpop.f32.mrf.mxu0
      %v1219 = vadd.f32 %v1020, %v1218
      %v1220 = vpop.f32.mrf.mxu0
      %1221 = vmatprep.mubr.f32.mxu0 0.0
      %1222 = vmatmul.mubr.f32.gmra.mxu0 %v1046
      %v1223 = vpop.f32.mrf.mxu0
      %v1224 = vadd.f32 %v1020, %v1223
      %v1225 = vpop.f32.mrf.mxu0
      %1226 = vmatprep.mubr.f32.mxu0 0.0
      %1227 = vmatmul.mubr.f32.gmra.mxu0 %v1049
      %v1228 = vpop.f32.mrf.mxu0
      %v1229 = vadd.f32 %v1020, %v1228
      %v1230 = vpop.f32.mrf.mxu0
      %1231 = vmatprep.mubr.f32.mxu0 0.0
      %1232 = vmatmul.mubr.f32.gmra.mxu0 %v1052
      %v1233 = vpop.f32.mrf.mxu0
      %v1234 = vadd.f32 %v1020, %v1233
      %v1235 = vpop.f32.mrf.mxu0
      %1236 = vmatprep.mubr.f32.mxu0 0.0
      %1237 = vmatmul.mubr.f32.gmra.mxu0 %v1055
      %v1238 = vpop.f32.mrf.mxu0
      %v1239 = vadd.f32 %v1020, %v1238
      %v1240 = vpop.f32.mrf.mxu0
      %1241 = vmatprep.mubr.f32.mxu0 0.0
      %1242 = vmatmul.mubr.f32.gmra.mxu0 %v1058
      %v1243 = vpop.f32.mrf.mxu0
      %v1244 = vadd.f32 %v1020, %v1243
      %v1245 = vpop.f32.mrf.mxu0
      %1246 = vmatprep.mubr.f32.mxu0 0.0
      %1247 = vmatmul.mubr.f32.gmra.mxu0 %v1061
      %v1248 = vpop.f32.mrf.mxu0
      %v1249 = vadd.f32 %v1020, %v1248
      %v1250 = vpop.f32.mrf.mxu0
      %1251 = vmatprep.mubr.f32.mxu0 0.0
      %1252 = vmatmul.mubr.f32.gmra.mxu0 %v1064
      %v1253 = vpop.f32.mrf.mxu0
      %v1254 = vadd.f32 %v1020, %v1253
      %v1255 = vpop.f32.mrf.mxu0
      %1256 = vmatprep.mubr.f32.mxu0 0.0
      %1257 = vmatmul.mubr.f32.gmra.mxu0 %v1067
      %v1258 = vpop.f32.mrf.mxu0
      %v1259 = vadd.f32 %v1020, %v1258
      %v1260 = vpop.f32.mrf.mxu0
      %1261 = vmatprep.mubr.f32.mxu0 0.0
      %1262 = vmatmul.mubr.f32.gmra.mxu0 %v1070
      %v1263 = vpop.f32.mrf.mxu0
      %v1264 = vadd.f32 %v1020, %v1263
      %v1265 = vpop.f32.mrf.mxu0
      %1266 = vmatprep.mubr.f32.mxu0 0.0
      %1267 = vmatmul.mubr.f32.gmra.mxu0 %v1073
      %v1268 = vpop.f32.mrf.mxu0
      %v1269 = vadd.f32 %v1020, %v1268
      %v1270 = vpop.f32.mrf.mxu0
      %1271 = vmatprep.mubr.f32.mxu0 0.0
      %1272 = vmatmul.mubr.f32.gmra.mxu0 %v1076
      %v1273 = vpop.f32.mrf.mxu0
      %v1274 = vadd.f32 %v1020, %v1273
      %v1275 = vpop.f32.mrf.mxu0
      %1276 = vmatprep.mubr.f32.mxu0 0.0
      %1277 = vmatmul.mubr.f32.gmra.mxu0 %v1079
      %v1278 = vpop.f32.mrf.mxu0
      %v1279 = vadd.f32 %v1020, %v1278
      %v1280 = vpop.f32.mrf.mxu0
      %1281 = vmatprep.mubr.f32.mxu0 0.0
      %1282 = vmatmul.mubr.f32.gmra.mxu0 %v1082
      %v1283 = vpop.f32.mrf.mxu0
      %v1284 = vadd.f32 %v1020, %v1283
      %v1285 = vpop.f32.mrf.mxu0
      %1286 = vmatprep.mubr.f32.mxu0 0.0
      %1287 = vmatmul.mubr.f32.gmra.mxu0 %v1085
      %v1288 = vpop.f32.mrf.mxu0
      %v1289 = vadd.f32 %v1020, %v1288
      %v1290 = vpop.f32.mrf.mxu0
      %1291 = vmatprep.mubr.f32.mxu0 0.0
      %1292 = vmatmul.mubr.f32.gmra.mxu0 %v1088
      %v1293 = vpop.f32.mrf.mxu0
      %v1294 = vadd.f32 %v1020, %v1293
      %v1295 = vpop.f32.mrf.mxu0
      %1296 = vmatprep.mubr.f32.mxu0 0.0
      %1297 = vmatmul.mubr.f32.gmra.mxu0 %v1091
      %v1298 = vpop.f32.mrf.mxu0
      %v1299 = vadd.f32 %v1020, %v1298
      %v1300 = vpop.f32.mrf.mxu0
      %1301 = vmatprep.mubr.f32.mxu0 0.0
      %1302 = vmatmul.mubr.f32.gmra.mxu0 %v1094
      %v1303 = vpop.f32.mrf.mxu0
      %v1304 = vadd.f32 %v1020, %v1303
      %v1305 = vpop.f32.mrf.mxu0
      %1306 = vmatprep.mubr.f32.mxu0 0.0
      %1307 = vmatmul.mubr.f32.gmra.mxu0 %v1097
      %v1308 = vpop.f32.mrf.mxu0
      %v1309 = vadd.f32 %v1020, %v1308
      %v1310 = vpop.f32.mrf.mxu0
      %1311 = vmatprep.mubr.f32.mxu0 0.0
      %1312 = vmatmul.mubr.f32.gmra.mxu0 %v1100
      %v1313 = vpop.f32.mrf.mxu0
      %v1314 = vadd.f32 %v1020, %v1313
      %v1315 = vpop.f32.mrf.mxu0
      %1316 = vmatprep.mubr.f32.mxu0 0.0
      %1317 = vmatmul.mubr.f32.gmra.mxu0 %v1103
      %v1318 = vpop.f32.mrf.mxu0
      %v1319 = vadd.f32 %v1020, %v1318
      %v1320 = vpop.f32.mrf.mxu0
      %1321 = vmatprep.mubr.f32.mxu0 0.0
      %1322 = vmatmul.mubr.f32.gmra.mxu0 %v1106
      %v1323 = vpop.f32.mrf.mxu0
      %v1324 = vadd.f32 %v1020, %v1323
      %v1325 = vpop.f32.mrf.mxu0
      %1326 = vmatprep.mubr.f32.mxu0 0.0
      %1327 = vmatmul.mubr.f32.gmra.mxu0 %v1109
      %v1328 = vpop.f32.mrf.mxu0
      %v1329 = vadd.f32 %v1020, %v1328
      %v1330 = vpop.f32.mrf.mxu0
      %1331 = vmatprep.mubr.f32.mxu0 0.0
      %1332 = vmatmul.mubr.f32.gmra.mxu0 %v1112
      %v1333 = vpop.f32.mrf.mxu0
      %v1334 = vadd.f32 %v1020, %v1333
      %v1335 = vpop.f32.mrf.mxu0
      %1336 = vmatprep.mubr.f32.mxu0 0.0
      %1337 = vmatmul.mubr.f32.gmra.mxu0 %v1115
      %v1338 = vpop.f32.mrf.mxu0
      %v1339 = vadd.f32 %v1020, %v1338
      %v1340 = vpop.f32.mrf.mxu0
      %1341 = vdwg.mxu0
      %v1342 = vmax.f32 %v1184, 0.0
      %v1343 = vmax.f32 %v1189, 0.0
      %v1344 = vmax.f32 %v1194, 0.0
      %v1345 = vmax.f32 %v1199, 0.0
      %v1346 = vmax.f32 %v1204, 0.0
      %v1347 = vmax.f32 %v1209, 0.0
      %v1348 = vmax.f32 %v1214, 0.0
      %v1349 = vmax.f32 %v1219, 0.0
      %v1350 = vmax.f32 %v1224, 0.0
      %v1351 = vmax.f32 %v1229, 0.0
      %v1352 = vmax.f32 %v1234, 0.0
      %v1353 = vmax.f32 %v1239, 0.0
      %v1354 = vmax.f32 %v1244, 0.0
      %v1355 = vmax.f32 %v1249, 0.0
      %v1356 = vmax.f32 %v1254, 0.0
      %v1357 = vmax.f32 %v1259, 0.0
      %v1358 = vmax.f32 %v1264, 0.0
      %v1359 = vmax.f32 %v1269, 0.0
      %v1360 = vmax.f32 %v1274, 0.0
      %v1361 = vmax.f32 %v1279, 0.0
      %v1362 = vmax.f32 %v1284, 0.0
      %v1363 = vmax.f32 %v1289, 0.0
      %v1364 = vmax.f32 %v1294, 0.0
      %v1365 = vmax.f32 %v1299, 0.0
      %v1366 = vmax.f32 %v1304, 0.0
      %v1367 = vmax.f32 %v1309, 0.0
      %v1368 = vmax.f32 %v1314, 0.0
      %v1369 = vmax.f32 %v1319, 0.0
      %v1370 = vmax.f32 %v1324, 0.0
      %v1371 = vmax.f32 %v1329, 0.0
      %v1372 = vmax.f32 %v1334, 0.0
      %v1373 = vmax.f32 %v1339, 0.0
      %v1374 = vld [vmem:[%s4] sm:$0xff]
      %v1375 = vld [vmem:[%s4 + $0x8] sm:$0xff]
      %v1376 = vld [vmem:[%s4 + $0x10] sm:$0xff]
      %v1377 = vld [vmem:[%s4 + $0x18] sm:$0xff]
      %v1378 = vlaneseq
      %v1379 = vshrl.u32 %v1378, 7
      %v1380 = vsub.s32 3, %v1379
      %v1381 = vrot.slane %v255, %v1380
      %v1383 = vsel %vm659, %v1342, 0
      %v1386 = vsel %vm659, %v1343, 0
      %v1389 = vsel %vm659, %v1344, 0
      %v1392 = vsel %vm659, %v1345, 0
      %v1395 = vsel %vm659, %v1346, 0
      %v1398 = vsel %vm659, %v1347, 0
      %v1401 = vsel %vm659, %v1348, 0
      %v1404 = vsel %vm659, %v1349, 0
      %v1407 = vsel %vm659, %v1350, 0
      %v1410 = vsel %vm659, %v1351, 0
      %v1413 = vsel %vm659, %v1352, 0
      %v1416 = vsel %vm659, %v1353, 0
      %v1419 = vsel %vm659, %v1354, 0
      %v1422 = vsel %vm659, %v1355, 0
      %v1425 = vsel %vm659, %v1356, 0
      %v1428 = vsel %vm659, %v1357, 0
      %v1431 = vsel %vm659, %v1358, 0
      %v1434 = vsel %vm659, %v1359, 0
      %v1437 = vsel %vm659, %v1360, 0
      %v1440 = vsel %vm659, %v1361, 0
      %v1443 = vsel %vm659, %v1362, 0
      %v1446 = vsel %vm659, %v1363, 0
      %v1449 = vsel %vm659, %v1364, 0
      %v1452 = vsel %vm659, %v1365, 0
      %v1455 = vsel %vm659, %v1366, 0
      %v1458 = vsel %vm659, %v1367, 0
      %v1461 = vsel %vm659, %v1368, 0
      %v1464 = vsel %vm659, %v1369, 0
      %v1467 = vsel %vm659, %v1370, 0
      %v1470 = vsel %vm659, %v1371, 0
      %v1473 = vsel %vm659, %v1372, 0
      %v1476 = vsel %vm659, %v1373, 0
      %1478 = vmatprep.subr.mxu0 0.0
      %1479 = vmatpush1.msra.mxu0 0.0
      %1480 = vmatprep.subr.mxu0 0.0
      %1481 = vmatpush1.msra.mxu0 0.0
      %1482 = vmatprep.subr.mxu0 0.0
      %1483 = vmatpush1.msra.mxu0 0.0
      %1484 = vmatprep.subr.mxu0 0.0
      %1485 = vmatpush1.msra.mxu0 0.0
      %1486 = vmatprep.subr.mxu0 0.0
      %1487 = vmatpush1.msra.mxu0 0.0
      %1488 = vmatprep.subr.mxu0 0.0
      %1489 = vmatpush1.msra.mxu0 0.0
      %1490 = vmatprep.subr.mxu0 0.0
      %1491 = vmatpush1.msra.mxu0 0.0
      %1492 = vmatprep.subr.mxu0 0.0
      %1493 = vmatpush1.msra.mxu0 0.0
      %1494 = vmatprep.subr.mxu0 0.0
      %1495 = vmatpush1.msra.mxu0 0.0
      %1496 = vmatprep.subr.mxu0 0.0
      %1497 = vmatpush1.msra.mxu0 0.0
      %1498 = vmatprep.subr.mxu0 0.0
      %1499 = vmatpush1.msra.mxu0 0.0
      %1500 = vmatprep.subr.mxu0 0.0
      %1501 = vmatpush1.msra.mxu0 0.0
      %1502 = vmatprep.subr.mxu0 0.0
      %1503 = vmatpush1.msra.mxu0 %v1377
      %1504 = vmatprep.subr.mxu0 0.0
      %1505 = vmatpush1.msra.mxu0 %v1376
      %1506 = vmatprep.subr.mxu0 0.0
      %1507 = vmatpush1.msra.mxu0 %v1375
      %1508 = vmatprep.subr.mxu0 0.0
      %1509 = vmatpush1.msra.mxu0 %v1374
      %1510 = vmatprep.subr.mxu0 0.0
      %1511 = vmatpush2.msra.mxu0 0.0
      %1512 = vmatprep.subr.mxu0 0.0
      %1513 = vmatpush2.msra.mxu0 0.0
      %1514 = vmatprep.subr.mxu0 0.0
      %1515 = vmatpush2.msra.mxu0 0.0
      %1516 = vmatprep.subr.mxu0 0.0
      %1517 = vmatpush2.msra.mxu0 0.0
      %1518 = vmatprep.subr.mxu0 0.0
      %1519 = vmatpush2.msra.mxu0 0.0
      %1520 = vmatprep.subr.mxu0 0.0
      %1521 = vmatpush2.msra.mxu0 0.0
      %1522 = vmatprep.subr.mxu0 0.0
      %1523 = vmatpush2.msra.mxu0 0.0
      %1524 = vmatprep.subr.mxu0 0.0
      %1525 = vmatpush2.msra.mxu0 0.0
      %1526 = vmatprep.subr.mxu0 0.0
      %1527 = vmatpush2.msra.mxu0 0.0
      %1528 = vmatprep.subr.mxu0 0.0
      %1529 = vmatpush2.msra.mxu0 0.0
      %1530 = vmatprep.subr.mxu0 0.0
      %1531 = vmatpush2.msra.mxu0 0.0
      %1532 = vmatprep.subr.mxu0 0.0
      %1533 = vmatpush2.msra.mxu0 0.0
      %1534 = vmatprep.subr.mxu0 0.0
      %1535 = vmatpush2.msra.mxu0 0.0
      %1536 = vmatprep.subr.mxu0 0.0
      %1537 = vmatpush2.msra.mxu0 0.0
      %1538 = vmatprep.subr.mxu0 0.0
      %1539 = vmatpush2.msra.mxu0 0.0
      %1540 = vmatprep.subr.mxu0 0.0
      %1541 = vmatpush2.msra.mxu0 0.0
      %1542 = vmatprep.mubr.f32.mxu0 0.0
      %1543 = vmatmul.mubr.f32.gmra.mxu0 %v1383
      %v1544 = vpop.f32.mrf.mxu0
      %v1545 = vadd.f32 %v1381, %v1544
      %v1546 = vpop.f32.mrf.mxu0
      %1547 = vmatprep.mubr.f32.mxu0 0.0
      %1548 = vmatmul.mubr.f32.gmra.mxu0 %v1386
      %v1549 = vpop.f32.mrf.mxu0
      %v1550 = vadd.f32 %v1381, %v1549
      %v1551 = vpop.f32.mrf.mxu0
      %1552 = vmatprep.mubr.f32.mxu0 0.0
      %1553 = vmatmul.mubr.f32.gmra.mxu0 %v1389
      %v1554 = vpop.f32.mrf.mxu0
      %v1555 = vadd.f32 %v1381, %v1554
      %v1556 = vpop.f32.mrf.mxu0
      %1557 = vmatprep.mubr.f32.mxu0 0.0
      %1558 = vmatmul.mubr.f32.gmra.mxu0 %v1392
      %v1559 = vpop.f32.mrf.mxu0
      %v1560 = vadd.f32 %v1381, %v1559
      %v1561 = vpop.f32.mrf.mxu0
      %1562 = vmatprep.mubr.f32.mxu0 0.0
      %1563 = vmatmul.mubr.f32.gmra.mxu0 %v1395
      %v1564 = vpop.f32.mrf.mxu0
      %v1565 = vadd.f32 %v1381, %v1564
      %v1566 = vpop.f32.mrf.mxu0
      %1567 = vmatprep.mubr.f32.mxu0 0.0
      %1568 = vmatmul.mubr.f32.gmra.mxu0 %v1398
      %v1569 = vpop.f32.mrf.mxu0
      %v1570 = vadd.f32 %v1381, %v1569
      %v1571 = vpop.f32.mrf.mxu0
      %1572 = vmatprep.mubr.f32.mxu0 0.0
      %1573 = vmatmul.mubr.f32.gmra.mxu0 %v1401
      %v1574 = vpop.f32.mrf.mxu0
      %v1575 = vadd.f32 %v1381, %v1574
      %v1576 = vpop.f32.mrf.mxu0
      %1577 = vmatprep.mubr.f32.mxu0 0.0
      %1578 = vmatmul.mubr.f32.gmra.mxu0 %v1404
      %v1579 = vpop.f32.mrf.mxu0
      %v1580 = vadd.f32 %v1381, %v1579
      %v1581 = vpop.f32.mrf.mxu0
      %1582 = vmatprep.mubr.f32.mxu0 0.0
      %1583 = vmatmul.mubr.f32.gmra.mxu0 %v1407
      %v1584 = vpop.f32.mrf.mxu0
      %v1585 = vadd.f32 %v1381, %v1584
      %v1586 = vpop.f32.mrf.mxu0
      %1587 = vmatprep.mubr.f32.mxu0 0.0
      %1588 = vmatmul.mubr.f32.gmra.mxu0 %v1410
      %v1589 = vpop.f32.mrf.mxu0
      %v1590 = vadd.f32 %v1381, %v1589
      %v1591 = vpop.f32.mrf.mxu0
      %1592 = vmatprep.mubr.f32.mxu0 0.0
      %1593 = vmatmul.mubr.f32.gmra.mxu0 %v1413
      %v1594 = vpop.f32.mrf.mxu0
      %v1595 = vadd.f32 %v1381, %v1594
      %v1596 = vpop.f32.mrf.mxu0
      %1597 = vmatprep.mubr.f32.mxu0 0.0
      %1598 = vmatmul.mubr.f32.gmra.mxu0 %v1416
      %v1599 = vpop.f32.mrf.mxu0
      %v1600 = vadd.f32 %v1381, %v1599
      %v1601 = vpop.f32.mrf.mxu0
      %1602 = vmatprep.mubr.f32.mxu0 0.0
      %1603 = vmatmul.mubr.f32.gmra.mxu0 %v1419
      %v1604 = vpop.f32.mrf.mxu0
      %v1605 = vadd.f32 %v1381, %v1604
      %v1606 = vpop.f32.mrf.mxu0
      %1607 = vmatprep.mubr.f32.mxu0 0.0
      %1608 = vmatmul.mubr.f32.gmra.mxu0 %v1422
      %v1609 = vpop.f32.mrf.mxu0
      %v1610 = vadd.f32 %v1381, %v1609
      %v1611 = vpop.f32.mrf.mxu0
      %1612 = vmatprep.mubr.f32.mxu0 0.0
      %1613 = vmatmul.mubr.f32.gmra.mxu0 %v1425
      %v1614 = vpop.f32.mrf.mxu0
      %v1615 = vadd.f32 %v1381, %v1614
      %v1616 = vpop.f32.mrf.mxu0
      %1617 = vmatprep.mubr.f32.mxu0 0.0
      %1618 = vmatmul.mubr.f32.gmra.mxu0 %v1428
      %v1619 = vpop.f32.mrf.mxu0
      %v1620 = vadd.f32 %v1381, %v1619
      %v1621 = vpop.f32.mrf.mxu0
      %1622 = vmatprep.mubr.f32.mxu0 0.0
      %1623 = vmatmul.mubr.f32.gmra.mxu0 %v1431
      %v1624 = vpop.f32.mrf.mxu0
      %v1625 = vadd.f32 %v1381, %v1624
      %v1626 = vpop.f32.mrf.mxu0
      %1627 = vmatprep.mubr.f32.mxu0 0.0
      %1628 = vmatmul.mubr.f32.gmra.mxu0 %v1434
      %v1629 = vpop.f32.mrf.mxu0
      %v1630 = vadd.f32 %v1381, %v1629
      %v1631 = vpop.f32.mrf.mxu0
      %1632 = vmatprep.mubr.f32.mxu0 0.0
      %1633 = vmatmul.mubr.f32.gmra.mxu0 %v1437
      %v1634 = vpop.f32.mrf.mxu0
      %v1635 = vadd.f32 %v1381, %v1634
      %v1636 = vpop.f32.mrf.mxu0
      %1637 = vmatprep.mubr.f32.mxu0 0.0
      %1638 = vmatmul.mubr.f32.gmra.mxu0 %v1440
      %v1639 = vpop.f32.mrf.mxu0
      %v1640 = vadd.f32 %v1381, %v1639
      %v1641 = vpop.f32.mrf.mxu0
      %1642 = vmatprep.mubr.f32.mxu0 0.0
      %1643 = vmatmul.mubr.f32.gmra.mxu0 %v1443
      %v1644 = vpop.f32.mrf.mxu0
      %v1645 = vadd.f32 %v1381, %v1644
      %v1646 = vpop.f32.mrf.mxu0
      %1647 = vmatprep.mubr.f32.mxu0 0.0
      %1648 = vmatmul.mubr.f32.gmra.mxu0 %v1446
      %v1649 = vpop.f32.mrf.mxu0
      %v1650 = vadd.f32 %v1381, %v1649
      %v1651 = vpop.f32.mrf.mxu0
      %1652 = vmatprep.mubr.f32.mxu0 0.0
      %1653 = vmatmul.mubr.f32.gmra.mxu0 %v1449
      %v1654 = vpop.f32.mrf.mxu0
      %v1655 = vadd.f32 %v1381, %v1654
      %v1656 = vpop.f32.mrf.mxu0
      %1657 = vmatprep.mubr.f32.mxu0 0.0
      %1658 = vmatmul.mubr.f32.gmra.mxu0 %v1452
      %v1659 = vpop.f32.mrf.mxu0
      %v1660 = vadd.f32 %v1381, %v1659
      %v1661 = vpop.f32.mrf.mxu0
      %1662 = vmatprep.mubr.f32.mxu0 0.0
      %1663 = vmatmul.mubr.f32.gmra.mxu0 %v1455
      %v1664 = vpop.f32.mrf.mxu0
      %v1665 = vadd.f32 %v1381, %v1664
      %v1666 = vpop.f32.mrf.mxu0
      %1667 = vmatprep.mubr.f32.mxu0 0.0
      %1668 = vmatmul.mubr.f32.gmra.mxu0 %v1458
      %v1669 = vpop.f32.mrf.mxu0
      %v1670 = vadd.f32 %v1381, %v1669
      %v1671 = vpop.f32.mrf.mxu0
      %1672 = vmatprep.mubr.f32.mxu0 0.0
      %1673 = vmatmul.mubr.f32.gmra.mxu0 %v1461
      %v1674 = vpop.f32.mrf.mxu0
      %v1675 = vadd.f32 %v1381, %v1674
      %v1676 = vpop.f32.mrf.mxu0
      %1677 = vmatprep.mubr.f32.mxu0 0.0
      %1678 = vmatmul.mubr.f32.gmra.mxu0 %v1464
      %v1679 = vpop.f32.mrf.mxu0
      %v1680 = vadd.f32 %v1381, %v1679
      %v1681 = vpop.f32.mrf.mxu0
      %1682 = vmatprep.mubr.f32.mxu0 0.0
      %1683 = vmatmul.mubr.f32.gmra.mxu0 %v1467
      %v1684 = vpop.f32.mrf.mxu0
      %v1685 = vadd.f32 %v1381, %v1684
      %v1686 = vpop.f32.mrf.mxu0
      %1687 = vmatprep.mubr.f32.mxu0 0.0
      %1688 = vmatmul.mubr.f32.gmra.mxu0 %v1470
      %v1689 = vpop.f32.mrf.mxu0
      %v1690 = vadd.f32 %v1381, %v1689
      %v1691 = vpop.f32.mrf.mxu0
      %1692 = vmatprep.mubr.f32.mxu0 0.0
      %1693 = vmatmul.mubr.f32.gmra.mxu0 %v1473
      %v1694 = vpop.f32.mrf.mxu0
      %v1695 = vadd.f32 %v1381, %v1694
      %v1696 = vpop.f32.mrf.mxu0
      %1697 = vmatprep.mubr.f32.mxu0 0.0
      %1698 = vmatmul.mubr.f32.gmra.mxu0 %v1476
      %v1699 = vpop.f32.mrf.mxu0
      %v1700 = vadd.f32 %v1381, %v1699
      %v1701 = vpop.f32.mrf.mxu0
      %1702 = vdwg.mxu0
      %vm1703 = vcmask 72704
      %1704 = vst.msk [vmem:[%s253] sm:$0xff] %vm1703, %v1545
      %1705 = vst.msk [vmem:[%s253 + $0x8] sm:$0xff] %vm1703, %v1550
      %1706 = vst.msk [vmem:[%s253 + $0x10] sm:$0xff] %vm1703, %v1555
      %1707 = vst.msk [vmem:[%s253 + $0x18] sm:$0xff] %vm1703, %v1560
      %1708 = vst.msk [vmem:[%s253 + $0x20] sm:$0xff] %vm1703, %v1565
      %1709 = vst.msk [vmem:[%s253 + $0x28] sm:$0xff] %vm1703, %v1570
      %1710 = vst.msk [vmem:[%s253 + $0x30] sm:$0xff] %vm1703, %v1575
      %1711 = vst.msk [vmem:[%s253 + $0x38] sm:$0xff] %vm1703, %v1580
      %1712 = vst.msk [vmem:[%s253 + $0x40] sm:$0xff] %vm1703, %v1585
      %1713 = vst.msk [vmem:[%s253 + $0x48] sm:$0xff] %vm1703, %v1590
      %1714 = vst.msk [vmem:[%s253 + $0x50] sm:$0xff] %vm1703, %v1595
      %1715 = vst.msk [vmem:[%s253 + $0x58] sm:$0xff] %vm1703, %v1600
      %1716 = vst.msk [vmem:[%s253 + $0x60] sm:$0xff] %vm1703, %v1605
      %1717 = vst.msk [vmem:[%s253 + $0x68] sm:$0xff] %vm1703, %v1610
      %1718 = vst.msk [vmem:[%s253 + $0x70] sm:$0xff] %vm1703, %v1615
      %1719 = vst.msk [vmem:[%s253 + $0x78] sm:$0xff] %vm1703, %v1620
      %1720 = vst.msk [vmem:[%s253 + $0x80] sm:$0xff] %vm1703, %v1625
      %1721 = vst.msk [vmem:[%s253 + $0x88] sm:$0xff] %vm1703, %v1630
      %1722 = vst.msk [vmem:[%s253 + $0x90] sm:$0xff] %vm1703, %v1635
      %1723 = vst.msk [vmem:[%s253 + $0x98] sm:$0xff] %vm1703, %v1640
      %1724 = vst.msk [vmem:[%s253 + $0xa0] sm:$0xff] %vm1703, %v1645
      %1725 = vst.msk [vmem:[%s253 + $0xa8] sm:$0xff] %vm1703, %v1650
      %1726 = vst.msk [vmem:[%s253 + $0xb0] sm:$0xff] %vm1703, %v1655
      %1727 = vst.msk [vmem:[%s253 + $0xb8] sm:$0xff] %vm1703, %v1660
      %1728 = vst.msk [vmem:[%s253 + $0xc0] sm:$0xff] %vm1703, %v1665
      %1729 = vst.msk [vmem:[%s253 + $0xc8] sm:$0xff] %vm1703, %v1670
      %1730 = vst.msk [vmem:[%s253 + $0xd0] sm:$0xff] %vm1703, %v1675
      %1731 = vst.msk [vmem:[%s253 + $0xd8] sm:$0xff] %vm1703, %v1680
      %1732 = vst.msk [vmem:[%s253 + $0xe0] sm:$0xff] %vm1703, %v1685
      %1733 = vst.msk [vmem:[%s253 + $0xe8] sm:$0xff] %vm1703, %v1690
      %1734 = vst.msk [vmem:[%s253 + $0xf0] sm:$0xff] %vm1703, %v1695
      %1735 = vst.msk [vmem:[%s253 + $0xf8] sm:$0xff] %vm1703, %v1700
      %s1736 = smul.u32 32, %s17
      %p1737 = scmp.lt.s32.totalorder %s1736, 63
      %s1738 = scalar_select %p1737, %s1736, 63
      %s1739 = smul.addr %s1738, 8
      %s1740 = scalar_lea.vmem %s6, %s1739
      // Predicated region
      $region45: #{tpu_custom_call.1} parent=43 // pred_check
        %p1741 = pneg %p166
      $region46: #{tpu_custom_call.1} parent=43 // pred_check_branch
        %1743 = sbr.rel (%p1741) target = $region48
      $region47: #{tpu_custom_call.1} parent=43 // pred_region
        %s1744 = smul.u32 32, %s17
      $region48: #{tpu_custom_call.1} parent=43 // pred_fallthru
        _
    $region44: #{tpu_custom_call.1} parent=5 // pred_fallthru
      _
    %p1745 = scmp.le.s32.totalorder 2, %s12
    // Predicated region
    $region49: #{tpu_custom_call.1} parent=5 // pred_check
      %p1746 = pneg %p1745
    $region50: #{tpu_custom_call.1} parent=5 // pred_check_branch
      %1748 = sbr.rel (%p1746) target = $region52
    $region51: #{tpu_custom_call.1} parent=5 // pred_region
      %s1749 = ssub.s32 %s12, 2
      // Predicated region
      $region53: #{tpu_custom_call.1} parent=51 // pred_check
        %p1750 = pneg %p172
      $region54: #{tpu_custom_call.1} parent=51 // pred_check_branch
        %1752 = sbr.rel (%p1750) target = $region56
      $region55: #{tpu_custom_call.1} parent=51 // pred_region
        %s1753 = smul.u32 32, %s18
        %p1754 = scmp.lt.s32.totalorder %s1753, 63
        %s1755 = scalar_select %p1754, %s1753, 63
        %s1756 = smul.addr %s1755, 8
        %s1757 = scalar_lea.vmem %s6, %s1756
      $region56: #{tpu_custom_call.1} parent=51 // pred_fallthru
        _
    $region52: #{tpu_custom_call.1} parent=5 // pred_fallthru
      _
  $region6: #{tpu_custom_call.1} parent=0 // loop_footer
    %s16 = sadd.s32 1, %s12
  $region7: #{tpu_custom_call.1} parent=0 // loop_footer_branch
    %11 = sbr.rel target = $region3
  $region8: #{tpu_custom_call.1} parent=0 // loop_exit
    _

</llo_original>
